<compile_context>
chip_gen: v5e
topology: v5e:2x2
jax: 0.10.0
libtpu: 0.0.40
codegen_flags: <defaults>
</compile_context>

<pallas_src>
import functools

import numpy as np

import jax
import jax.numpy as jnp
from jax.experimental import pallas as pl
from jax.experimental.pallas import tpu as pltpu


_F32 = jnp.float32


def _elu(x):
    # ELU(alpha=1); clamp before exp so the unselected branch never sees large x.
    return jnp.where(x > 0, x, jnp.exp(jnp.minimum(x, 0.0)) - 1.0)


# ----------------------------------------------------------------------------- kernel

def gridnet_kernel(x_ref, a1_ref, b1_ref, a2_ref, b2_ref, a3_ref, b3_ref,
                   wpre_ref, bpre_ref, wpb_ref, bpb_ref,
                   scores_ref, action_ref, *, dims):
    N, H, Hp, H2, H3, half = dims          # half = Wp*16 (lane width of one pool phase)
    E = (H + 1) // 2                       # rows in the even-parity block of the input

    # Hoist every weight / bias load out of the unrolled per-image loop (ref loads are
    # not CSE'd).
    A1 = [a1_ref[di] for di in range(a1_ref.shape[0])]
    A2 = [a2_ref[di] for di in range(a2_ref.shape[0])]
    A3 = [a3_ref[di] for di in range(a3_ref.shape[0])]
    WP = [wpre_ref[h] for h in range(wpre_ref.shape[0])]
    b1 = b1_ref[...]
    b2 = b2_ref[...]
    b3 = b3_ref[...]
    bpre = bpre_ref[...]
    wpb = wpb_ref[...]
    bpb = bpb_ref[...]

    def row_start(n, hbase):
        # Input rows were de-interleaved on the host: [h even ...][h odd ...] per image,
        # so the rows {2p + hbase : p in [0, Hp)} are a contiguous block.
        blk = (hbase // 2) if (hbase % 2 == 0) else (E + hbase // 2)
        return n * H + blk

    y3_rows = [[] for _ in range(H3)]      # y3_rows[h][n] = (1, W3*64)

    for n in range(N):
        # ---- conv1 (2x2, 3->16) + ELU, computed per output-row parity `a` so the
        #      2x2/stride-2 maxpool over H is a plain elementwise max of two arrays.
        phase = []
        for a in range(2):
            acc = None
            for di in range(2):
                rows = x_ref[pl.ds(row_start(n, a + di), Hp), :]        # (Hp, W*3)
                t = jnp.dot(rows, A1[di], preferred_element_type=_F32)  # (Hp, 2*Wp*16)
                acc = t if acc is None else acc + t
            phase.append(_elu(acc + b1))
        # ---- fused maxpool: W-phases are the two lane halves (host-permuted columns),
        #      H-phases are the two `phase` arrays.
        pooled = jnp.maximum(
            jnp.maximum(phase[0][:, :half], phase[0][:, half:]),
            jnp.maximum(phase[1][:, :half], phase[1][:, half:]))        # (Hp, Wp*16)

        # ---- conv2 (2x2, 16->32) + ELU
        acc = None
        for di in range(2):
            t = jnp.dot(pooled[di:di + H2, :], A2[di], preferred_element_type=_F32)
            acc = t if acc is None else acc + t
        y2 = _elu(acc + b2)                                             # (H2, W2*32)

        # ---- conv3 (2x2, 32->64) + ELU
        acc = None
        for di in range(2):
            t = jnp.dot(y2[di:di + H3, :], A3[di], preferred_element_type=_F32)
            acc = t if acc is None else acc + t
        y3 = _elu(acc + b3)                                             # (H3, W3*64)

        for h in range(H3):
            y3_rows[h].append(y3[h:h + 1, :])

    # ---- precore Linear + ReLU, batched over all N images.  PyTorch's channel-major
    #      flatten is folded into the WP[h] layout at prep time.
    acc = None
    for h in range(H3):
        Yh = jnp.concatenate(y3_rows[h], axis=0)                        # (N, W3*64)
        t = jnp.dot(Yh, WP[h], preferred_element_type=_F32)
        acc = t if acc is None else acc + t
    core = jnp.maximum(acc + bpre, 0.0)                                 # (N, emb)

    # ---- packed heads: cols [0:A) = policy logits, col A = baseline
    scores = jnp.dot(core, wpb, preferred_element_type=_F32) + bpb      # (N, A+1)
    scores_ref[...] = scores.astype(scores_ref.dtype)

    # ---- greedy action = argmax over logits (first maximal index, eval-mode semantics)
    num_actions = wpb.shape[1] - 1
    logits = scores[:, :num_actions]
    m = jnp.max(logits, axis=1, keepdims=True)
    ids = jax.lax.broadcasted_iota(jnp.int32, logits.shape, 1)
    big = jnp.int32(2 ** 31 - 1)
    cand = jnp.where(logits == m, ids, big)
    action_ref[...] = jnp.min(cand, axis=1, keepdims=True).astype(jnp.int32)


# ----------------------------------------------------------------------------- host-side prep

def _banded_conv_taps(wt, Wi):
    """Fold the kw / W-axis part of a 2x2 conv into a banded matrix per kernel row di.

    wt: (kh, kw, Cin, Cout).  Returns A of shape (kh, Wi*Cin, Wo*Cout) such that
        conv_out_rows = sum_di input_rows[di:di+Ho] @ A[di]
    with activations laid out as lane = w*C + c.
    """
    kh, kw, Cin, Cout = wt.shape
    Wo = Wi - kw + 1
    A = np.zeros((kh, Wi * Cin, Wo * Cout), np.float32)
    for di in range(kh):
        for dj in range(kw):
            for wo in range(Wo):
                wi = wo + dj
                A[di, wi * Cin:(wi + 1) * Cin, wo * Cout:(wo + 1) * Cout] += \
                    np.asarray(wt[di, dj], np.float32)
    return A


def init_params(key, H, W, embedding_size, num_actions):
    """Random params in a PyTorch-equivalent layout: conv weights (kh,kw,Cin,Cout);
    w_pre rows in the NCHW (channel-major) flatten order."""
    image_embedding_size = ((H - 1) // 2 - 2) * ((W - 1) // 2 - 2) * 64
    ks = jax.random.split(key, 12)
    s = 0.1
    p = dict(
        w1=s * jax.random.normal(ks[0], (2, 2, 3, 16), _F32),
        b1=s * jax.random.normal(ks[1], (16,), _F32),
        w2=s * jax.random.normal(ks[2], (2, 2, 16, 32), _F32),
        b2=s * jax.random.normal(ks[3], (32,), _F32),
        w3=s * jax.random.normal(ks[4], (2, 2, 32, 64), _F32),
        b3=s * jax.random.normal(ks[5], (64,), _F32),
        w_pre=s * jax.random.normal(ks[6], (image_embedding_size, embedding_size), _F32),
        b_pre=s * jax.random.normal(ks[7], (embedding_size,), _F32),
        w_pol=s * jax.random.normal(ks[8], (embedding_size, num_actions), _F32),
        b_pol=s * jax.random.normal(ks[9], (num_actions,), _F32),
        w_base=s * jax.random.normal(ks[10], (embedding_size, 1), _F32),
        b_base=s * jax.random.normal(ks[11], (1,), _F32),
    )
    return p, image_embedding_size


def prepare_params(params, H, W):
    """One-time, batch-independent prep: banded conv weights, pool-phase column
    permutation for conv1, lane-tiled biases, NCHW-flatten folded into the precore
    weight, lane-packed policy/baseline head.  Everything pre-cast to f32."""
    Ho, Wo = H - 1, W - 1
    Hp, Wp = Ho // 2, Wo // 2
    H2, W2 = Hp - 1, Wp - 1
    H3, W3 = H2 - 1, W2 - 1
    emb = params["w_pre"].shape[1]

    w1 = np.asarray(params["w1"], np.float32)
    b1 = np.asarray(params["b1"], np.float32)
    w2 = np.asarray(params["w2"], np.float32)
    b2 = np.asarray(params["b2"], np.float32)
    w3 = np.asarray(params["w3"], np.float32)
    b3 = np.asarray(params["b3"], np.float32)
    w_pre = np.asarray(params["w_pre"], np.float32)
    b_pre = np.asarray(params["b_pre"], np.float32)
    w_pol = np.asarray(params["w_pol"], np.float32)
    b_pol = np.asarray(params["b_pol"], np.float32)
    w_base = np.asarray(params["w_base"], np.float32)
    b_base = np.asarray(params["b_base"], np.float32)

    # conv1: banded weights with output columns permuted into (pool-phase b, pooled
    # col q, cout) order and truncated to the 2*Wp columns the maxpool consumes.
    A1 = _banded_conv_taps(w1, W)                                     # (2, W*3, Wo*16)
    perm = np.array([(2 * q + b) * 16 + c
                     for b in (0, 1) for q in range(Wp) for c in range(16)], np.int32)
    A1p = np.ascontiguousarray(A1[:, :, perm])                        # (2, W*3, 2*Wp*16)
    b1p = np.tile(b1, 2 * Wp)[None, :]

    A2 = _banded_conv_taps(w2, Wp)                                    # (2, Wp*16, W2*32)
    b2t = np.tile(b2, W2)[None, :]
    A3 = _banded_conv_taps(w3, W2)                                    # (2, W2*32, W3*64)
    b3t = np.tile(b3, W3)[None, :]

    # precore: fold PyTorch's channel-major .view(T*B, -1) flatten into the weight:
    # row (w3*64 + c) of block h3 corresponds to w_pre row (c*H3*W3 + h3*W3 + w3).
    wpre = w_pre.reshape(64, H3, W3, emb).transpose(1, 2, 0, 3).reshape(H3, W3 * 64, emb)

    w_pb = np.concatenate([w_pol, w_base], axis=1)                    # (emb, A+1)
    b_pb = np.concatenate([b_pol, b_base])[None, :]

    f32 = lambda a: jnp.asarray(a, jnp.float32)
    return dict(a1=f32(A1p), b1=f32(b1p), a2=f32(A2), b2=f32(b2t), a3=f32(A3), b3=f32(b3t),
                wpre=f32(wpre), b_pre=f32(b_pre[None, :]), w_pb=f32(w_pb), b_pb=f32(b_pb))


# ----------------------------------------------------------------------------- forward

def gridnet_forward(frame, prep, num_actions):
    """Eval-mode (self.training == False), use_lstm == False forward pass.

    frame: (T, B, H, W, 3) float32
    returns (dict(policy_logits=(T,B,A), baseline=(T,B), action=(T,B) int32), core_state=())
    """
    T, B, H, W, C = frame.shape
    N = T * B
    A = num_actions
    Ho, Wo = H - 1, W - 1
    Hp, Wp = Ho // 2, Wo // 2
    H2, H3 = Hp - 1, Hp - 2

    # Host-side layout plumbing only: (T,B,H,W,3) -> (N, H, W*3) lane-dense rows, then
    # de-interleave the H rows (evens first, odds second) per image so every in-kernel
    # row access is a contiguous static slice; finally flatten to (N*H, W*3).
    perm_h = jnp.asarray(
        np.concatenate([np.arange(0, H, 2), np.arange(1, H, 2)]).astype(np.int32))
    xin = frame.reshape(N, H, W * C).astype(jnp.float32)
    xin = jnp.take(xin, perm_h, axis=1).reshape(N * H, W * C)

    args = (xin, prep["a1"], prep["b1"], prep["a2"], prep["b2"], prep["a3"], prep["b3"],
            prep["wpre"], prep["b_pre"], prep["w_pb"], prep["b_pb"])

    dims = (N, H, Hp, H2, H3, Wp * 16)
    kernel = functools.partial(gridnet_kernel, dims=dims)

    vmem = pltpu.MemorySpace.VMEM
    scores, action = pl.pallas_call(
        kernel,
        out_shape=(jax.ShapeDtypeStruct((N, A + 1), jnp.float32),
                   jax.ShapeDtypeStruct((N, 1), jnp.int32)),
        in_specs=[pl.BlockSpec(memory_space=vmem) for _ in args],
        out_specs=(pl.BlockSpec(memory_space=vmem),
                   pl.BlockSpec(memory_space=vmem)),
    )(*args)

    # TODO(synk): use_lstm=True LSTM core and training-mode multinomial sampling are not
    # implemented (constructor default use_lstm=False, eval-mode greedy argmax).
    policy_logits = scores[:, :A].reshape(T, B, A)
    baseline = scores[:, A].reshape(T, B)
    action = action.reshape(T, B)
    return dict(policy_logits=policy_logits, baseline=baseline, action=action), tuple()


# ----------------------------------------------------------------------------- main

if __name__ == "__main__":
    key = jax.random.PRNGKey(0)
    k_param, k_frame = jax.random.split(key)

    T, B, H, W = 2, 2, 9, 9
    embedding_size = 32
    num_actions = 5

    params, image_emb = init_params(k_param, H, W, embedding_size, num_actions)
    assert image_emb == ((H - 1) // 2 - 2) * ((W - 1) // 2 - 2) * 64

    prep = prepare_params(params, H, W)
    frame = jax.random.uniform(k_frame, (T, B, H, W, 3), jnp.float32)

    fwd = jax.jit(functools.partial(gridnet_forward, num_actions=num_actions))
    out, core_state = fwd(frame, prep)
    jax.block_until_ready(out)

    assert out["policy_logits"].shape == (T, B, num_actions)
    assert out["baseline"].shape == (T, B)
    assert out["action"].shape == (T, B)
    assert out["action"].dtype == jnp.int32
    assert core_state == tuple()
    assert bool(jnp.all(jnp.isfinite(out["policy_logits"])))
    assert bool(jnp.all(jnp.isfinite(out["baseline"])))
    print("KERNEL_OK")
</pallas_src>

<mosaic_0001>
module attributes {stable_mosaic.version = 11 : i64} {
  func.func @gridnet_kernel(%arg0: memref<36x27xf32, #tpu.memory_space<vmem>>, %arg1: memref<2x27x128xf32, #tpu.memory_space<vmem>>, %arg2: memref<1x128xf32, #tpu.memory_space<vmem>>, %arg3: memref<2x64x96xf32, #tpu.memory_space<vmem>>, %arg4: memref<1x96xf32, #tpu.memory_space<vmem>>, %arg5: memref<2x96x128xf32, #tpu.memory_space<vmem>>, %arg6: memref<1x128xf32, #tpu.memory_space<vmem>>, %arg7: memref<2x128x32xf32, #tpu.memory_space<vmem>>, %arg8: memref<1x32xf32, #tpu.memory_space<vmem>>, %arg9: memref<32x6xf32, #tpu.memory_space<vmem>>, %arg10: memref<1x6xf32, #tpu.memory_space<vmem>>, %arg11: memref<4x6xf32, #tpu.memory_space<vmem>>, %arg12: memref<4x1xi32, #tpu.memory_space<vmem>>) attributes {dimension_semantics = [], scalar_prefetch = 0 : i64, scratch_operands = 0 : i64, tpu.core_type = #tpu.core_type<tc>} {
    %c0 = arith.constant 0 : index
    %c0_0 = arith.constant 0 : index
    %c0_1 = arith.constant 0 : index
    %0 = vector.load %arg1[%c0, %c0_0, %c0_1] : memref<2x27x128xf32, #tpu.memory_space<vmem>>, vector<1x27x128xf32>
    %1 = vector.shape_cast %0 : vector<1x27x128xf32> to vector<27x128xf32>
    %c1 = arith.constant 1 : index
    %c0_2 = arith.constant 0 : index
    %c0_3 = arith.constant 0 : index
    %2 = vector.load %arg1[%c1, %c0_2, %c0_3] : memref<2x27x128xf32, #tpu.memory_space<vmem>>, vector<1x27x128xf32>
    %3 = vector.shape_cast %2 : vector<1x27x128xf32> to vector<27x128xf32>
    %c0_4 = arith.constant 0 : index
    %c0_5 = arith.constant 0 : index
    %c0_6 = arith.constant 0 : index
    %4 = vector.load %arg3[%c0_4, %c0_5, %c0_6] : memref<2x64x96xf32, #tpu.memory_space<vmem>>, vector<1x64x96xf32>
    %5 = vector.shape_cast %4 : vector<1x64x96xf32> to vector<64x96xf32>
    %c1_7 = arith.constant 1 : index
    %c0_8 = arith.constant 0 : index
    %c0_9 = arith.constant 0 : index
    %6 = vector.load %arg3[%c1_7, %c0_8, %c0_9] : memref<2x64x96xf32, #tpu.memory_space<vmem>>, vector<1x64x96xf32>
    %7 = vector.shape_cast %6 : vector<1x64x96xf32> to vector<64x96xf32>
    %c0_10 = arith.constant 0 : index
    %c0_11 = arith.constant 0 : index
    %c0_12 = arith.constant 0 : index
    %8 = vector.load %arg5[%c0_10, %c0_11, %c0_12] : memref<2x96x128xf32, #tpu.memory_space<vmem>>, vector<1x96x128xf32>
    %9 = vector.shape_cast %8 : vector<1x96x128xf32> to vector<96x128xf32>
    %c1_13 = arith.constant 1 : index
    %c0_14 = arith.constant 0 : index
    %c0_15 = arith.constant 0 : index
    %10 = vector.load %arg5[%c1_13, %c0_14, %c0_15] : memref<2x96x128xf32, #tpu.memory_space<vmem>>, vector<1x96x128xf32>
    %11 = vector.shape_cast %10 : vector<1x96x128xf32> to vector<96x128xf32>
    %c0_16 = arith.constant 0 : index
    %c0_17 = arith.constant 0 : index
    %c0_18 = arith.constant 0 : index
    %12 = vector.load %arg7[%c0_16, %c0_17, %c0_18] : memref<2x128x32xf32, #tpu.memory_space<vmem>>, vector<1x128x32xf32>
    %13 = vector.shape_cast %12 : vector<1x128x32xf32> to vector<128x32xf32>
    %c1_19 = arith.constant 1 : index
    %c0_20 = arith.constant 0 : index
    %c0_21 = arith.constant 0 : index
    %14 = vector.load %arg7[%c1_19, %c0_20, %c0_21] : memref<2x128x32xf32, #tpu.memory_space<vmem>>, vector<1x128x32xf32>
    %15 = vector.shape_cast %14 : vector<1x128x32xf32> to vector<128x32xf32>
    %c0_22 = arith.constant 0 : index
    %c0_23 = arith.constant 0 : index
    %16 = vector.load %arg2[%c0_22, %c0_23] : memref<1x128xf32, #tpu.memory_space<vmem>>, vector<1x128xf32>
    %c0_24 = arith.constant 0 : index
    %c0_25 = arith.constant 0 : index
    %17 = vector.load %arg4[%c0_24, %c0_25] : memref<1x96xf32, #tpu.memory_space<vmem>>, vector<1x96xf32>
    %c0_26 = arith.constant 0 : index
    %c0_27 = arith.constant 0 : index
    %18 = vector.load %arg6[%c0_26, %c0_27] : memref<1x128xf32, #tpu.memory_space<vmem>>, vector<1x128xf32>
    %c0_28 = arith.constant 0 : index
    %c0_29 = arith.constant 0 : index
    %19 = vector.load %arg8[%c0_28, %c0_29] : memref<1x32xf32, #tpu.memory_space<vmem>>, vector<1x32xf32>
    %c0_30 = arith.constant 0 : index
    %c0_31 = arith.constant 0 : index
    %20 = vector.load %arg9[%c0_30, %c0_31] : memref<32x6xf32, #tpu.memory_space<vmem>>, vector<32x6xf32>
    %c0_32 = arith.constant 0 : index
    %c0_33 = arith.constant 0 : index
    %21 = vector.load %arg10[%c0_32, %c0_33] : memref<1x6xf32, #tpu.memory_space<vmem>>, vector<1x6xf32>
    %c0_34 = arith.constant 0 : index
    %c0_35 = arith.constant 0 : index
    %22 = vector.load %arg0[%c0_34, %c0_35] : memref<36x27xf32, #tpu.memory_space<vmem>>, vector<4x27xf32>
    %cst = arith.constant dense<0.000000e+00> : vector<4x128xf32>
    %23 = tpu.matmul %22, %1, %cst {dimension_numbers = #tpu.dot_dimension_numbers<[1], [0], [0], [1], [0, 0, 1, 1], [], []>} : vector<4x27xf32>, vector<27x128xf32>, vector<4x128xf32> -> vector<4x128xf32>
    %c5 = arith.constant 5 : index
    %c0_36 = arith.constant 0 : index
    %24 = vector.load %arg0[%c5, %c0_36] : memref<36x27xf32, #tpu.memory_space<vmem>>, vector<4x27xf32>
    %cst_37 = arith.constant dense<0.000000e+00> : vector<4x128xf32>
    %25 = tpu.matmul %24, %3, %cst_37 {dimension_numbers = #tpu.dot_dimension_numbers<[1], [0], [0], [1], [0, 0, 1, 1], [], []>} : vector<4x27xf32>, vector<27x128xf32>, vector<4x128xf32> -> vector<4x128xf32>
    %26 = arith.addf %23, %25 : vector<4x128xf32>
    %27 = vector.broadcast %16 : vector<1x128xf32> to vector<4x128xf32>
    %28 = arith.addf %26, %27 : vector<4x128xf32>
    %cst_38 = arith.constant 0.000000e+00 : f32
    %29 = vector.broadcast %cst_38 : f32 to vector<4x128xf32>
    %30 = arith.cmpf ogt, %28, %29 : vector<4x128xf32>
    %cst_39 = arith.constant 0.000000e+00 : f32
    %31 = vector.broadcast %cst_39 : f32 to vector<4x128xf32>
    %32 = arith.minimumf %28, %31 : vector<4x128xf32>
    %33 = math.exp %32 : vector<4x128xf32>
    %cst_40 = arith.constant 1.000000e+00 : f32
    %34 = vector.broadcast %cst_40 : f32 to vector<4x128xf32>
    %35 = arith.subf %33, %34 : vector<4x128xf32>
    %36 = arith.select %30, %28, %35 : vector<4x128xi1>, vector<4x128xf32>
    %c5_41 = arith.constant 5 : index
    %c0_42 = arith.constant 0 : index
    %37 = vector.load %arg0[%c5_41, %c0_42] : memref<36x27xf32, #tpu.memory_space<vmem>>, vector<4x27xf32>
    %cst_43 = arith.constant dense<0.000000e+00> : vector<4x128xf32>
    %38 = tpu.matmul %37, %1, %cst_43 {dimension_numbers = #tpu.dot_dimension_numbers<[1], [0], [0], [1], [0, 0, 1, 1], [], []>} : vector<4x27xf32>, vector<27x128xf32>, vector<4x128xf32> -> vector<4x128xf32>
    %c1_44 = arith.constant 1 : index
    %c0_45 = arith.constant 0 : index
    %39 = vector.load %arg0[%c1_44, %c0_45] : memref<36x27xf32, #tpu.memory_space<vmem>>, vector<4x27xf32>
    %cst_46 = arith.constant dense<0.000000e+00> : vector<4x128xf32>
    %40 = tpu.matmul %39, %3, %cst_46 {dimension_numbers = #tpu.dot_dimension_numbers<[1], [0], [0], [1], [0, 0, 1, 1], [], []>} : vector<4x27xf32>, vector<27x128xf32>, vector<4x128xf32> -> vector<4x128xf32>
    %41 = arith.addf %38, %40 : vector<4x128xf32>
    %42 = vector.broadcast %16 : vector<1x128xf32> to vector<4x128xf32>
    %43 = arith.addf %41, %42 : vector<4x128xf32>
    %cst_47 = arith.constant 0.000000e+00 : f32
    %44 = vector.broadcast %cst_47 : f32 to vector<4x128xf32>
    %45 = arith.cmpf ogt, %43, %44 : vector<4x128xf32>
    %cst_48 = arith.constant 0.000000e+00 : f32
    %46 = vector.broadcast %cst_48 : f32 to vector<4x128xf32>
    %47 = arith.minimumf %43, %46 : vector<4x128xf32>
    %48 = math.exp %47 : vector<4x128xf32>
    %cst_49 = arith.constant 1.000000e+00 : f32
    %49 = vector.broadcast %cst_49 : f32 to vector<4x128xf32>
    %50 = arith.subf %48, %49 : vector<4x128xf32>
    %51 = arith.select %45, %43, %50 : vector<4x128xi1>, vector<4x128xf32>
    %52 = vector.extract_strided_slice %36 {offsets = [0, 0], sizes = [4, 64], strides = [1, 1]} : vector<4x128xf32> to vector<4x64xf32>
    %53 = vector.extract_strided_slice %36 {offsets = [0, 64], sizes = [4, 64], strides = [1, 1]} : vector<4x128xf32> to vector<4x64xf32>
    %54 = arith.maximumf %52, %53 : vector<4x64xf32>
    %55 = vector.extract_strided_slice %51 {offsets = [0, 0], sizes = [4, 64], strides = [1, 1]} : vector<4x128xf32> to vector<4x64xf32>
    %56 = vector.extract_strided_slice %51 {offsets = [0, 64], sizes = [4, 64], strides = [1, 1]} : vector<4x128xf32> to vector<4x64xf32>
    %57 = arith.maximumf %55, %56 : vector<4x64xf32>
    %58 = arith.maximumf %54, %57 : vector<4x64xf32>
    %59 = vector.extract_strided_slice %58 {offsets = [0, 0], sizes = [3, 64], strides = [1, 1]} : vector<4x64xf32> to vector<3x64xf32>
    %cst_50 = arith.constant dense<0.000000e+00> : vector<3x96xf32>
    %60 = tpu.matmul %59, %5, %cst_50 {dimension_numbers = #tpu.dot_dimension_numbers<[1], [0], [0], [1], [0, 0, 1, 1], [], []>} : vector<3x64xf32>, vector<64x96xf32>, vector<3x96xf32> -> vector<3x96xf32>
    %61 = vector.extract_strided_slice %58 {offsets = [1, 0], sizes = [3, 64], strides = [1, 1]} : vector<4x64xf32> to vector<3x64xf32>
    %cst_51 = arith.constant dense<0.000000e+00> : vector<3x96xf32>
    %62 = tpu.matmul %61, %7, %cst_51 {dimension_numbers = #tpu.dot_dimension_numbers<[1], [0], [0], [1], [0, 0, 1, 1], [], []>} : vector<3x64xf32>, vector<64x96xf32>, vector<3x96xf32> -> vector<3x96xf32>
    %63 = arith.addf %60, %62 : vector<3x96xf32>
    %64 = vector.broadcast %17 : vector<1x96xf32> to vector<3x96xf32>
    %65 = arith.addf %63, %64 : vector<3x96xf32>
    %cst_52 = arith.constant 0.000000e+00 : f32
    %66 = vector.broadcast %cst_52 : f32 to vector<3x96xf32>
    %67 = arith.cmpf ogt, %65, %66 : vector<3x96xf32>
    %cst_53 = arith.constant 0.000000e+00 : f32
    %68 = vector.broadcast %cst_53 : f32 to vector<3x96xf32>
    %69 = arith.minimumf %65, %68 : vector<3x96xf32>
    %70 = math.exp %69 : vector<3x96xf32>
    %cst_54 = arith.constant 1.000000e+00 : f32
    %71 = vector.broadcast %cst_54 : f32 to vector<3x96xf32>
    %72 = arith.subf %70, %71 : vector<3x96xf32>
    %73 = arith.select %67, %65, %72 : vector<3x96xi1>, vector<3x96xf32>
    %74 = vector.extract_strided_slice %73 {offsets = [0, 0], sizes = [2, 96], strides = [1, 1]} : vector<3x96xf32> to vector<2x96xf32>
    %cst_55 = arith.constant dense<0.000000e+00> : vector<2x128xf32>
    %75 = tpu.matmul %74, %9, %cst_55 {dimension_numbers = #tpu.dot_dimension_numbers<[1], [0], [0], [1], [0, 0, 1, 1], [], []>} : vector<2x96xf32>, vector<96x128xf32>, vector<2x128xf32> -> vector<2x128xf32>
    %76 = vector.extract_strided_slice %73 {offsets = [1, 0], sizes = [2, 96], strides = [1, 1]} : vector<3x96xf32> to vector<2x96xf32>
    %cst_56 = arith.constant dense<0.000000e+00> : vector<2x128xf32>
    %77 = tpu.matmul %76, %11, %cst_56 {dimension_numbers = #tpu.dot_dimension_numbers<[1], [0], [0], [1], [0, 0, 1, 1], [], []>} : vector<2x96xf32>, vector<96x128xf32>, vector<2x128xf32> -> vector<2x128xf32>
    %78 = arith.addf %75, %77 : vector<2x128xf32>
    %79 = vector.broadcast %18 : vector<1x128xf32> to vector<2x128xf32>
    %80 = arith.addf %78, %79 : vector<2x128xf32>
    %cst_57 = arith.constant 0.000000e+00 : f32
    %81 = vector.broadcast %cst_57 : f32 to vector<2x128xf32>
    %82 = arith.cmpf ogt, %80, %81 : vector<2x128xf32>
    %cst_58 = arith.constant 0.000000e+00 : f32
    %83 = vector.broadcast %cst_58 : f32 to vector<2x128xf32>
    %84 = arith.minimumf %80, %83 : vector<2x128xf32>
    %85 = math.exp %84 : vector<2x128xf32>
    %cst_59 = arith.constant 1.000000e+00 : f32
    %86 = vector.broadcast %cst_59 : f32 to vector<2x128xf32>
    %87 = arith.subf %85, %86 : vector<2x128xf32>
    %88 = arith.select %82, %80, %87 : vector<2x128xi1>, vector<2x128xf32>
    %89 = vector.extract_strided_slice %88 {offsets = [0, 0], sizes = [1, 128], strides = [1, 1]} : vector<2x128xf32> to vector<1x128xf32>
    %90 = vector.extract_strided_slice %88 {offsets = [1, 0], sizes = [1, 128], strides = [1, 1]} : vector<2x128xf32> to vector<1x128xf32>
    %c9 = arith.constant 9 : index
    %c0_60 = arith.constant 0 : index
    %91 = vector.load %arg0[%c9, %c0_60] : memref<36x27xf32, #tpu.memory_space<vmem>>, vector<4x27xf32>
    %cst_61 = arith.constant dense<0.000000e+00> : vector<4x128xf32>
    %92 = tpu.matmul %91, %1, %cst_61 {dimension_numbers = #tpu.dot_dimension_numbers<[1], [0], [0], [1], [0, 0, 1, 1], [], []>} : vector<4x27xf32>, vector<27x128xf32>, vector<4x128xf32> -> vector<4x128xf32>
    %c14 = arith.constant 14 : index
    %c0_62 = arith.constant 0 : index
    %93 = vector.load %arg0[%c14, %c0_62] : memref<36x27xf32, #tpu.memory_space<vmem>>, vector<4x27xf32>
    %cst_63 = arith.constant dense<0.000000e+00> : vector<4x128xf32>
    %94 = tpu.matmul %93, %3, %cst_63 {dimension_numbers = #tpu.dot_dimension_numbers<[1], [0], [0], [1], [0, 0, 1, 1], [], []>} : vector<4x27xf32>, vector<27x128xf32>, vector<4x128xf32> -> vector<4x128xf32>
    %95 = arith.addf %92, %94 : vector<4x128xf32>
    %96 = vector.broadcast %16 : vector<1x128xf32> to vector<4x128xf32>
    %97 = arith.addf %95, %96 : vector<4x128xf32>
    %cst_64 = arith.constant 0.000000e+00 : f32
    %98 = vector.broadcast %cst_64 : f32 to vector<4x128xf32>
    %99 = arith.cmpf ogt, %97, %98 : vector<4x128xf32>
    %cst_65 = arith.constant 0.000000e+00 : f32
    %100 = vector.broadcast %cst_65 : f32 to vector<4x128xf32>
    %101 = arith.minimumf %97, %100 : vector<4x128xf32>
    %102 = math.exp %101 : vector<4x128xf32>
    %cst_66 = arith.constant 1.000000e+00 : f32
    %103 = vector.broadcast %cst_66 : f32 to vector<4x128xf32>
    %104 = arith.subf %102, %103 : vector<4x128xf32>
    %105 = arith.select %99, %97, %104 : vector<4x128xi1>, vector<4x128xf32>
    %c14_67 = arith.constant 14 : index
    %c0_68 = arith.constant 0 : index
    %106 = vector.load %arg0[%c14_67, %c0_68] : memref<36x27xf32, #tpu.memory_space<vmem>>, vector<4x27xf32>
    %cst_69 = arith.constant dense<0.000000e+00> : vector<4x128xf32>
    %107 = tpu.matmul %106, %1, %cst_69 {dimension_numbers = #tpu.dot_dimension_numbers<[1], [0], [0], [1], [0, 0, 1, 1], [], []>} : vector<4x27xf32>, vector<27x128xf32>, vector<4x128xf32> -> vector<4x128xf32>
    %c10 = arith.constant 10 : index
    %c0_70 = arith.constant 0 : index
    %108 = vector.load %arg0[%c10, %c0_70] : memref<36x27xf32, #tpu.memory_space<vmem>>, vector<4x27xf32>
    %cst_71 = arith.constant dense<0.000000e+00> : vector<4x128xf32>
    %109 = tpu.matmul %108, %3, %cst_71 {dimension_numbers = #tpu.dot_dimension_numbers<[1], [0], [0], [1], [0, 0, 1, 1], [], []>} : vector<4x27xf32>, vector<27x128xf32>, vector<4x128xf32> -> vector<4x128xf32>
    %110 = arith.addf %107, %109 : vector<4x128xf32>
    %111 = vector.broadcast %16 : vector<1x128xf32> to vector<4x128xf32>
    %112 = arith.addf %110, %111 : vector<4x128xf32>
    %cst_72 = arith.constant 0.000000e+00 : f32
    %113 = vector.broadcast %cst_72 : f32 to vector<4x128xf32>
    %114 = arith.cmpf ogt, %112, %113 : vector<4x128xf32>
    %cst_73 = arith.constant 0.000000e+00 : f32
    %115 = vector.broadcast %cst_73 : f32 to vector<4x128xf32>
    %116 = arith.minimumf %112, %115 : vector<4x128xf32>
    %117 = math.exp %116 : vector<4x128xf32>
    %cst_74 = arith.constant 1.000000e+00 : f32
    %118 = vector.broadcast %cst_74 : f32 to vector<4x128xf32>
    %119 = arith.subf %117, %118 : vector<4x128xf32>
    %120 = arith.select %114, %112, %119 : vector<4x128xi1>, vector<4x128xf32>
    %121 = vector.extract_strided_slice %105 {offsets = [0, 0], sizes = [4, 64], strides = [1, 1]} : vector<4x128xf32> to vector<4x64xf32>
    %122 = vector.extract_strided_slice %105 {offsets = [0, 64], sizes = [4, 64], strides = [1, 1]} : vector<4x128xf32> to vector<4x64xf32>
    %123 = arith.maximumf %121, %122 : vector<4x64xf32>
    %124 = vector.extract_strided_slice %120 {offsets = [0, 0], sizes = [4, 64], strides = [1, 1]} : vector<4x128xf32> to vector<4x64xf32>
    %125 = vector.extract_strided_slice %120 {offsets = [0, 64], sizes = [4, 64], strides = [1, 1]} : vector<4x128xf32> to vector<4x64xf32>
    %126 = arith.maximumf %124, %125 : vector<4x64xf32>
    %127 = arith.maximumf %123, %126 : vector<4x64xf32>
    %128 = vector.extract_strided_slice %127 {offsets = [0, 0], sizes = [3, 64], strides = [1, 1]} : vector<4x64xf32> to vector<3x64xf32>
    %cst_75 = arith.constant dense<0.000000e+00> : vector<3x96xf32>
    %129 = tpu.matmul %128, %5, %cst_75 {dimension_numbers = #tpu.dot_dimension_numbers<[1], [0], [0], [1], [0, 0, 1, 1], [], []>} : vector<3x64xf32>, vector<64x96xf32>, vector<3x96xf32> -> vector<3x96xf32>
    %130 = vector.extract_strided_slice %127 {offsets = [1, 0], sizes = [3, 64], strides = [1, 1]} : vector<4x64xf32> to vector<3x64xf32>
    %cst_76 = arith.constant dense<0.000000e+00> : vector<3x96xf32>
    %131 = tpu.matmul %130, %7, %cst_76 {dimension_numbers = #tpu.dot_dimension_numbers<[1], [0], [0], [1], [0, 0, 1, 1], [], []>} : vector<3x64xf32>, vector<64x96xf32>, vector<3x96xf32> -> vector<3x96xf32>
    %132 = arith.addf %129, %131 : vector<3x96xf32>
    %133 = vector.broadcast %17 : vector<1x96xf32> to vector<3x96xf32>
    %134 = arith.addf %132, %133 : vector<3x96xf32>
    %cst_77 = arith.constant 0.000000e+00 : f32
    %135 = vector.broadcast %cst_77 : f32 to vector<3x96xf32>
    %136 = arith.cmpf ogt, %134, %135 : vector<3x96xf32>
    %cst_78 = arith.constant 0.000000e+00 : f32
    %137 = vector.broadcast %cst_78 : f32 to vector<3x96xf32>
    %138 = arith.minimumf %134, %137 : vector<3x96xf32>
    %139 = math.exp %138 : vector<3x96xf32>
    %cst_79 = arith.constant 1.000000e+00 : f32
    %140 = vector.broadcast %cst_79 : f32 to vector<3x96xf32>
    %141 = arith.subf %139, %140 : vector<3x96xf32>
    %142 = arith.select %136, %134, %141 : vector<3x96xi1>, vector<3x96xf32>
    %143 = vector.extract_strided_slice %142 {offsets = [0, 0], sizes = [2, 96], strides = [1, 1]} : vector<3x96xf32> to vector<2x96xf32>
    %cst_80 = arith.constant dense<0.000000e+00> : vector<2x128xf32>
    %144 = tpu.matmul %143, %9, %cst_80 {dimension_numbers = #tpu.dot_dimension_numbers<[1], [0], [0], [1], [0, 0, 1, 1], [], []>} : vector<2x96xf32>, vector<96x128xf32>, vector<2x128xf32> -> vector<2x128xf32>
    %145 = vector.extract_strided_slice %142 {offsets = [1, 0], sizes = [2, 96], strides = [1, 1]} : vector<3x96xf32> to vector<2x96xf32>
    %cst_81 = arith.constant dense<0.000000e+00> : vector<2x128xf32>
    %146 = tpu.matmul %145, %11, %cst_81 {dimension_numbers = #tpu.dot_dimension_numbers<[1], [0], [0], [1], [0, 0, 1, 1], [], []>} : vector<2x96xf32>, vector<96x128xf32>, vector<2x128xf32> -> vector<2x128xf32>
    %147 = arith.addf %144, %146 : vector<2x128xf32>
    %148 = vector.broadcast %18 : vector<1x128xf32> to vector<2x128xf32>
    %149 = arith.addf %147, %148 : vector<2x128xf32>
    %cst_82 = arith.constant 0.000000e+00 : f32
    %150 = vector.broadcast %cst_82 : f32 to vector<2x128xf32>
    %151 = arith.cmpf ogt, %149, %150 : vector<2x128xf32>
    %cst_83 = arith.constant 0.000000e+00 : f32
    %152 = vector.broadcast %cst_83 : f32 to vector<2x128xf32>
    %153 = arith.minimumf %149, %152 : vector<2x128xf32>
    %154 = math.exp %153 : vector<2x128xf32>
    %cst_84 = arith.constant 1.000000e+00 : f32
    %155 = vector.broadcast %cst_84 : f32 to vector<2x128xf32>
    %156 = arith.subf %154, %155 : vector<2x128xf32>
    %157 = arith.select %151, %149, %156 : vector<2x128xi1>, vector<2x128xf32>
    %158 = vector.extract_strided_slice %157 {offsets = [0, 0], sizes = [1, 128], strides = [1, 1]} : vector<2x128xf32> to vector<1x128xf32>
    %159 = vector.extract_strided_slice %157 {offsets = [1, 0], sizes = [1, 128], strides = [1, 1]} : vector<2x128xf32> to vector<1x128xf32>
    %c18 = arith.constant 18 : index
    %c0_85 = arith.constant 0 : index
    %160 = vector.load %arg0[%c18, %c0_85] : memref<36x27xf32, #tpu.memory_space<vmem>>, vector<4x27xf32>
    %cst_86 = arith.constant dense<0.000000e+00> : vector<4x128xf32>
    %161 = tpu.matmul %160, %1, %cst_86 {dimension_numbers = #tpu.dot_dimension_numbers<[1], [0], [0], [1], [0, 0, 1, 1], [], []>} : vector<4x27xf32>, vector<27x128xf32>, vector<4x128xf32> -> vector<4x128xf32>
    %c23 = arith.constant 23 : index
    %c0_87 = arith.constant 0 : index
    %162 = vector.load %arg0[%c23, %c0_87] : memref<36x27xf32, #tpu.memory_space<vmem>>, vector<4x27xf32>
    %cst_88 = arith.constant dense<0.000000e+00> : vector<4x128xf32>
    %163 = tpu.matmul %162, %3, %cst_88 {dimension_numbers = #tpu.dot_dimension_numbers<[1], [0], [0], [1], [0, 0, 1, 1], [], []>} : vector<4x27xf32>, vector<27x128xf32>, vector<4x128xf32> -> vector<4x128xf32>
    %164 = arith.addf %161, %163 : vector<4x128xf32>
    %165 = vector.broadcast %16 : vector<1x128xf32> to vector<4x128xf32>
    %166 = arith.addf %164, %165 : vector<4x128xf32>
    %cst_89 = arith.constant 0.000000e+00 : f32
    %167 = vector.broadcast %cst_89 : f32 to vector<4x128xf32>
    %168 = arith.cmpf ogt, %166, %167 : vector<4x128xf32>
    %cst_90 = arith.constant 0.000000e+00 : f32
    %169 = vector.broadcast %cst_90 : f32 to vector<4x128xf32>
    %170 = arith.minimumf %166, %169 : vector<4x128xf32>
    %171 = math.exp %170 : vector<4x128xf32>
    %cst_91 = arith.constant 1.000000e+00 : f32
    %172 = vector.broadcast %cst_91 : f32 to vector<4x128xf32>
    %173 = arith.subf %171, %172 : vector<4x128xf32>
    %174 = arith.select %168, %166, %173 : vector<4x128xi1>, vector<4x128xf32>
    %c23_92 = arith.constant 23 : index
    %c0_93 = arith.constant 0 : index
    %175 = vector.load %arg0[%c23_92, %c0_93] : memref<36x27xf32, #tpu.memory_space<vmem>>, vector<4x27xf32>
    %cst_94 = arith.constant dense<0.000000e+00> : vector<4x128xf32>
    %176 = tpu.matmul %175, %1, %cst_94 {dimension_numbers = #tpu.dot_dimension_numbers<[1], [0], [0], [1], [0, 0, 1, 1], [], []>} : vector<4x27xf32>, vector<27x128xf32>, vector<4x128xf32> -> vector<4x128xf32>
    %c19 = arith.constant 19 : index
    %c0_95 = arith.constant 0 : index
    %177 = vector.load %arg0[%c19, %c0_95] : memref<36x27xf32, #tpu.memory_space<vmem>>, vector<4x27xf32>
    %cst_96 = arith.constant dense<0.000000e+00> : vector<4x128xf32>
    %178 = tpu.matmul %177, %3, %cst_96 {dimension_numbers = #tpu.dot_dimension_numbers<[1], [0], [0], [1], [0, 0, 1, 1], [], []>} : vector<4x27xf32>, vector<27x128xf32>, vector<4x128xf32> -> vector<4x128xf32>
    %179 = arith.addf %176, %178 : vector<4x128xf32>
    %180 = vector.broadcast %16 : vector<1x128xf32> to vector<4x128xf32>
    %181 = arith.addf %179, %180 : vector<4x128xf32>
    %cst_97 = arith.constant 0.000000e+00 : f32
    %182 = vector.broadcast %cst_97 : f32 to vector<4x128xf32>
    %183 = arith.cmpf ogt, %181, %182 : vector<4x128xf32>
    %cst_98 = arith.constant 0.000000e+00 : f32
    %184 = vector.broadcast %cst_98 : f32 to vector<4x128xf32>
    %185 = arith.minimumf %181, %184 : vector<4x128xf32>
    %186 = math.exp %185 : vector<4x128xf32>
    %cst_99 = arith.constant 1.000000e+00 : f32
    %187 = vector.broadcast %cst_99 : f32 to vector<4x128xf32>
    %188 = arith.subf %186, %187 : vector<4x128xf32>
    %189 = arith.select %183, %181, %188 : vector<4x128xi1>, vector<4x128xf32>
    %190 = vector.extract_strided_slice %174 {offsets = [0, 0], sizes = [4, 64], strides = [1, 1]} : vector<4x128xf32> to vector<4x64xf32>
    %191 = vector.extract_strided_slice %174 {offsets = [0, 64], sizes = [4, 64], strides = [1, 1]} : vector<4x128xf32> to vector<4x64xf32>
    %192 = arith.maximumf %190, %191 : vector<4x64xf32>
    %193 = vector.extract_strided_slice %189 {offsets = [0, 0], sizes = [4, 64], strides = [1, 1]} : vector<4x128xf32> to vector<4x64xf32>
    %194 = vector.extract_strided_slice %189 {offsets = [0, 64], sizes = [4, 64], strides = [1, 1]} : vector<4x128xf32> to vector<4x64xf32>
    %195 = arith.maximumf %193, %194 : vector<4x64xf32>
    %196 = arith.maximumf %192, %195 : vector<4x64xf32>
    %197 = vector.extract_strided_slice %196 {offsets = [0, 0], sizes = [3, 64], strides = [1, 1]} : vector<4x64xf32> to vector<3x64xf32>
    %cst_100 = arith.constant dense<0.000000e+00> : vector<3x96xf32>
    %198 = tpu.matmul %197, %5, %cst_100 {dimension_numbers = #tpu.dot_dimension_numbers<[1], [0], [0], [1], [0, 0, 1, 1], [], []>} : vector<3x64xf32>, vector<64x96xf32>, vector<3x96xf32> -> vector<3x96xf32>
    %199 = vector.extract_strided_slice %196 {offsets = [1, 0], sizes = [3, 64], strides = [1, 1]} : vector<4x64xf32> to vector<3x64xf32>
    %cst_101 = arith.constant dense<0.000000e+00> : vector<3x96xf32>
    %200 = tpu.matmul %199, %7, %cst_101 {dimension_numbers = #tpu.dot_dimension_numbers<[1], [0], [0], [1], [0, 0, 1, 1], [], []>} : vector<3x64xf32>, vector<64x96xf32>, vector<3x96xf32> -> vector<3x96xf32>
    %201 = arith.addf %198, %200 : vector<3x96xf32>
    %202 = vector.broadcast %17 : vector<1x96xf32> to vector<3x96xf32>
    %203 = arith.addf %201, %202 : vector<3x96xf32>
    %cst_102 = arith.constant 0.000000e+00 : f32
    %204 = vector.broadcast %cst_102 : f32 to vector<3x96xf32>
    %205 = arith.cmpf ogt, %203, %204 : vector<3x96xf32>
    %cst_103 = arith.constant 0.000000e+00 : f32
    %206 = vector.broadcast %cst_103 : f32 to vector<3x96xf32>
    %207 = arith.minimumf %203, %206 : vector<3x96xf32>
    %208 = math.exp %207 : vector<3x96xf32>
    %cst_104 = arith.constant 1.000000e+00 : f32
    %209 = vector.broadcast %cst_104 : f32 to vector<3x96xf32>
    %210 = arith.subf %208, %209 : vector<3x96xf32>
    %211 = arith.select %205, %203, %210 : vector<3x96xi1>, vector<3x96xf32>
    %212 = vector.extract_strided_slice %211 {offsets = [0, 0], sizes = [2, 96], strides = [1, 1]} : vector<3x96xf32> to vector<2x96xf32>
    %cst_105 = arith.constant dense<0.000000e+00> : vector<2x128xf32>
    %213 = tpu.matmul %212, %9, %cst_105 {dimension_numbers = #tpu.dot_dimension_numbers<[1], [0], [0], [1], [0, 0, 1, 1], [], []>} : vector<2x96xf32>, vector<96x128xf32>, vector<2x128xf32> -> vector<2x128xf32>
    %214 = vector.extract_strided_slice %211 {offsets = [1, 0], sizes = [2, 96], strides = [1, 1]} : vector<3x96xf32> to vector<2x96xf32>
    %cst_106 = arith.constant dense<0.000000e+00> : vector<2x128xf32>
    %215 = tpu.matmul %214, %11, %cst_106 {dimension_numbers = #tpu.dot_dimension_numbers<[1], [0], [0], [1], [0, 0, 1, 1], [], []>} : vector<2x96xf32>, vector<96x128xf32>, vector<2x128xf32> -> vector<2x128xf32>
    %216 = arith.addf %213, %215 : vector<2x128xf32>
    %217 = vector.broadcast %18 : vector<1x128xf32> to vector<2x128xf32>
    %218 = arith.addf %216, %217 : vector<2x128xf32>
    %cst_107 = arith.constant 0.000000e+00 : f32
    %219 = vector.broadcast %cst_107 : f32 to vector<2x128xf32>
    %220 = arith.cmpf ogt, %218, %219 : vector<2x128xf32>
    %cst_108 = arith.constant 0.000000e+00 : f32
    %221 = vector.broadcast %cst_108 : f32 to vector<2x128xf32>
    %222 = arith.minimumf %218, %221 : vector<2x128xf32>
    %223 = math.exp %222 : vector<2x128xf32>
    %cst_109 = arith.constant 1.000000e+00 : f32
    %224 = vector.broadcast %cst_109 : f32 to vector<2x128xf32>
    %225 = arith.subf %223, %224 : vector<2x128xf32>
    %226 = arith.select %220, %218, %225 : vector<2x128xi1>, vector<2x128xf32>
    %227 = vector.extract_strided_slice %226 {offsets = [0, 0], sizes = [1, 128], strides = [1, 1]} : vector<2x128xf32> to vector<1x128xf32>
    %228 = vector.extract_strided_slice %226 {offsets = [1, 0], sizes = [1, 128], strides = [1, 1]} : vector<2x128xf32> to vector<1x128xf32>
    %c27 = arith.constant 27 : index
    %c0_110 = arith.constant 0 : index
    %229 = vector.load %arg0[%c27, %c0_110] : memref<36x27xf32, #tpu.memory_space<vmem>>, vector<4x27xf32>
    %cst_111 = arith.constant dense<0.000000e+00> : vector<4x128xf32>
    %230 = tpu.matmul %229, %1, %cst_111 {dimension_numbers = #tpu.dot_dimension_numbers<[1], [0], [0], [1], [0, 0, 1, 1], [], []>} : vector<4x27xf32>, vector<27x128xf32>, vector<4x128xf32> -> vector<4x128xf32>
    %c32 = arith.constant 32 : index
    %c0_112 = arith.constant 0 : index
    %231 = vector.load %arg0[%c32, %c0_112] : memref<36x27xf32, #tpu.memory_space<vmem>>, vector<4x27xf32>
    %cst_113 = arith.constant dense<0.000000e+00> : vector<4x128xf32>
    %232 = tpu.matmul %231, %3, %cst_113 {dimension_numbers = #tpu.dot_dimension_numbers<[1], [0], [0], [1], [0, 0, 1, 1], [], []>} : vector<4x27xf32>, vector<27x128xf32>, vector<4x128xf32> -> vector<4x128xf32>
    %233 = arith.addf %230, %232 : vector<4x128xf32>
    %234 = vector.broadcast %16 : vector<1x128xf32> to vector<4x128xf32>
    %235 = arith.addf %233, %234 : vector<4x128xf32>
    %cst_114 = arith.constant 0.000000e+00 : f32
    %236 = vector.broadcast %cst_114 : f32 to vector<4x128xf32>
    %237 = arith.cmpf ogt, %235, %236 : vector<4x128xf32>
    %cst_115 = arith.constant 0.000000e+00 : f32
    %238 = vector.broadcast %cst_115 : f32 to vector<4x128xf32>
    %239 = arith.minimumf %235, %238 : vector<4x128xf32>
    %240 = math.exp %239 : vector<4x128xf32>
    %cst_116 = arith.constant 1.000000e+00 : f32
    %241 = vector.broadcast %cst_116 : f32 to vector<4x128xf32>
    %242 = arith.subf %240, %241 : vector<4x128xf32>
    %243 = arith.select %237, %235, %242 : vector<4x128xi1>, vector<4x128xf32>
    %c32_117 = arith.constant 32 : index
    %c0_118 = arith.constant 0 : index
    %244 = vector.load %arg0[%c32_117, %c0_118] : memref<36x27xf32, #tpu.memory_space<vmem>>, vector<4x27xf32>
    %cst_119 = arith.constant dense<0.000000e+00> : vector<4x128xf32>
    %245 = tpu.matmul %244, %1, %cst_119 {dimension_numbers = #tpu.dot_dimension_numbers<[1], [0], [0], [1], [0, 0, 1, 1], [], []>} : vector<4x27xf32>, vector<27x128xf32>, vector<4x128xf32> -> vector<4x128xf32>
    %c28 = arith.constant 28 : index
    %c0_120 = arith.constant 0 : index
    %246 = vector.load %arg0[%c28, %c0_120] : memref<36x27xf32, #tpu.memory_space<vmem>>, vector<4x27xf32>
    %cst_121 = arith.constant dense<0.000000e+00> : vector<4x128xf32>
    %247 = tpu.matmul %246, %3, %cst_121 {dimension_numbers = #tpu.dot_dimension_numbers<[1], [0], [0], [1], [0, 0, 1, 1], [], []>} : vector<4x27xf32>, vector<27x128xf32>, vector<4x128xf32> -> vector<4x128xf32>
    %248 = arith.addf %245, %247 : vector<4x128xf32>
    %249 = vector.broadcast %16 : vector<1x128xf32> to vector<4x128xf32>
    %250 = arith.addf %248, %249 : vector<4x128xf32>
    %cst_122 = arith.constant 0.000000e+00 : f32
    %251 = vector.broadcast %cst_122 : f32 to vector<4x128xf32>
    %252 = arith.cmpf ogt, %250, %251 : vector<4x128xf32>
    %cst_123 = arith.constant 0.000000e+00 : f32
    %253 = vector.broadcast %cst_123 : f32 to vector<4x128xf32>
    %254 = arith.minimumf %250, %253 : vector<4x128xf32>
    %255 = math.exp %254 : vector<4x128xf32>
    %cst_124 = arith.constant 1.000000e+00 : f32
    %256 = vector.broadcast %cst_124 : f32 to vector<4x128xf32>
    %257 = arith.subf %255, %256 : vector<4x128xf32>
    %258 = arith.select %252, %250, %257 : vector<4x128xi1>, vector<4x128xf32>
    %259 = vector.extract_strided_slice %243 {offsets = [0, 0], sizes = [4, 64], strides = [1, 1]} : vector<4x128xf32> to vector<4x64xf32>
    %260 = vector.extract_strided_slice %243 {offsets = [0, 64], sizes = [4, 64], strides = [1, 1]} : vector<4x128xf32> to vector<4x64xf32>
    %261 = arith.maximumf %259, %260 : vector<4x64xf32>
    %262 = vector.extract_strided_slice %258 {offsets = [0, 0], sizes = [4, 64], strides = [1, 1]} : vector<4x128xf32> to vector<4x64xf32>
    %263 = vector.extract_strided_slice %258 {offsets = [0, 64], sizes = [4, 64], strides = [1, 1]} : vector<4x128xf32> to vector<4x64xf32>
    %264 = arith.maximumf %262, %263 : vector<4x64xf32>
    %265 = arith.maximumf %261, %264 : vector<4x64xf32>
    %266 = vector.extract_strided_slice %265 {offsets = [0, 0], sizes = [3, 64], strides = [1, 1]} : vector<4x64xf32> to vector<3x64xf32>
    %cst_125 = arith.constant dense<0.000000e+00> : vector<3x96xf32>
    %267 = tpu.matmul %266, %5, %cst_125 {dimension_numbers = #tpu.dot_dimension_numbers<[1], [0], [0], [1], [0, 0, 1, 1], [], []>} : vector<3x64xf32>, vector<64x96xf32>, vector<3x96xf32> -> vector<3x96xf32>
    %268 = vector.extract_strided_slice %265 {offsets = [1, 0], sizes = [3, 64], strides = [1, 1]} : vector<4x64xf32> to vector<3x64xf32>
    %cst_126 = arith.constant dense<0.000000e+00> : vector<3x96xf32>
    %269 = tpu.matmul %268, %7, %cst_126 {dimension_numbers = #tpu.dot_dimension_numbers<[1], [0], [0], [1], [0, 0, 1, 1], [], []>} : vector<3x64xf32>, vector<64x96xf32>, vector<3x96xf32> -> vector<3x96xf32>
    %270 = arith.addf %267, %269 : vector<3x96xf32>
    %271 = vector.broadcast %17 : vector<1x96xf32> to vector<3x96xf32>
    %272 = arith.addf %270, %271 : vector<3x96xf32>
    %cst_127 = arith.constant 0.000000e+00 : f32
    %273 = vector.broadcast %cst_127 : f32 to vector<3x96xf32>
    %274 = arith.cmpf ogt, %272, %273 : vector<3x96xf32>
    %cst_128 = arith.constant 0.000000e+00 : f32
    %275 = vector.broadcast %cst_128 : f32 to vector<3x96xf32>
    %276 = arith.minimumf %272, %275 : vector<3x96xf32>
    %277 = math.exp %276 : vector<3x96xf32>
    %cst_129 = arith.constant 1.000000e+00 : f32
    %278 = vector.broadcast %cst_129 : f32 to vector<3x96xf32>
    %279 = arith.subf %277, %278 : vector<3x96xf32>
    %280 = arith.select %274, %272, %279 : vector<3x96xi1>, vector<3x96xf32>
    %281 = vector.extract_strided_slice %280 {offsets = [0, 0], sizes = [2, 96], strides = [1, 1]} : vector<3x96xf32> to vector<2x96xf32>
    %cst_130 = arith.constant dense<0.000000e+00> : vector<2x128xf32>
    %282 = tpu.matmul %281, %9, %cst_130 {dimension_numbers = #tpu.dot_dimension_numbers<[1], [0], [0], [1], [0, 0, 1, 1], [], []>} : vector<2x96xf32>, vector<96x128xf32>, vector<2x128xf32> -> vector<2x128xf32>
    %283 = vector.extract_strided_slice %280 {offsets = [1, 0], sizes = [2, 96], strides = [1, 1]} : vector<3x96xf32> to vector<2x96xf32>
    %cst_131 = arith.constant dense<0.000000e+00> : vector<2x128xf32>
    %284 = tpu.matmul %283, %11, %cst_131 {dimension_numbers = #tpu.dot_dimension_numbers<[1], [0], [0], [1], [0, 0, 1, 1], [], []>} : vector<2x96xf32>, vector<96x128xf32>, vector<2x128xf32> -> vector<2x128xf32>
    %285 = arith.addf %282, %284 : vector<2x128xf32>
    %286 = vector.broadcast %18 : vector<1x128xf32> to vector<2x128xf32>
    %287 = arith.addf %285, %286 : vector<2x128xf32>
    %cst_132 = arith.constant 0.000000e+00 : f32
    %288 = vector.broadcast %cst_132 : f32 to vector<2x128xf32>
    %289 = arith.cmpf ogt, %287, %288 : vector<2x128xf32>
    %cst_133 = arith.constant 0.000000e+00 : f32
    %290 = vector.broadcast %cst_133 : f32 to vector<2x128xf32>
    %291 = arith.minimumf %287, %290 : vector<2x128xf32>
    %292 = math.exp %291 : vector<2x128xf32>
    %cst_134 = arith.constant 1.000000e+00 : f32
    %293 = vector.broadcast %cst_134 : f32 to vector<2x128xf32>
    %294 = arith.subf %292, %293 : vector<2x128xf32>
    %295 = arith.select %289, %287, %294 : vector<2x128xi1>, vector<2x128xf32>
    %296 = vector.extract_strided_slice %295 {offsets = [0, 0], sizes = [1, 128], strides = [1, 1]} : vector<2x128xf32> to vector<1x128xf32>
    %297 = vector.extract_strided_slice %295 {offsets = [1, 0], sizes = [1, 128], strides = [1, 1]} : vector<2x128xf32> to vector<1x128xf32>
    %298 = tpu.concatenate %89, %158, %227, %296 in 0 : vector<1x128xf32>, vector<1x128xf32>, vector<1x128xf32>, vector<1x128xf32> -> vector<4x128xf32>
    %cst_135 = arith.constant dense<0.000000e+00> : vector<4x32xf32>
    %299 = tpu.matmul %298, %13, %cst_135 {dimension_numbers = #tpu.dot_dimension_numbers<[1], [0], [0], [1], [0, 0, 1, 1], [], []>} : vector<4x128xf32>, vector<128x32xf32>, vector<4x32xf32> -> vector<4x32xf32>
    %300 = tpu.concatenate %90, %159, %228, %297 in 0 : vector<1x128xf32>, vector<1x128xf32>, vector<1x128xf32>, vector<1x128xf32> -> vector<4x128xf32>
    %cst_136 = arith.constant dense<0.000000e+00> : vector<4x32xf32>
    %301 = tpu.matmul %300, %15, %cst_136 {dimension_numbers = #tpu.dot_dimension_numbers<[1], [0], [0], [1], [0, 0, 1, 1], [], []>} : vector<4x128xf32>, vector<128x32xf32>, vector<4x32xf32> -> vector<4x32xf32>
    %302 = arith.addf %299, %301 : vector<4x32xf32>
    %303 = vector.broadcast %19 : vector<1x32xf32> to vector<4x32xf32>
    %304 = arith.addf %302, %303 : vector<4x32xf32>
    %cst_137 = arith.constant 0.000000e+00 : f32
    %305 = vector.broadcast %cst_137 : f32 to vector<4x32xf32>
    %306 = arith.maximumf %304, %305 : vector<4x32xf32>
    %cst_138 = arith.constant dense<0.000000e+00> : vector<4x6xf32>
    %307 = tpu.matmul %306, %20, %cst_138 {dimension_numbers = #tpu.dot_dimension_numbers<[1], [0], [0], [1], [0, 0, 1, 1], [], []>} : vector<4x32xf32>, vector<32x6xf32>, vector<4x6xf32> -> vector<4x6xf32>
    %308 = vector.broadcast %21 : vector<1x6xf32> to vector<4x6xf32>
    %309 = arith.addf %307, %308 : vector<4x6xf32>
    %c0_139 = arith.constant 0 : index
    %c0_140 = arith.constant 0 : index
    %310 = vector.load %arg11[%c0_139, %c0_140] : memref<4x6xf32, #tpu.memory_space<vmem>>, vector<4x6xf32>
    tpu.vector_store %arg11[%c0_139, %c0_140], %309 {strides = array<i32>} : memref<4x6xf32, #tpu.memory_space<vmem>>, vector<4x6xf32>,
    %311 = vector.extract_strided_slice %309 {offsets = [0, 0], sizes = [4, 5], strides = [1, 1]} : vector<4x6xf32> to vector<4x5xf32>
    %cst_141 = arith.constant dense<0xFF800000> : vector<4xf32>
    %312 = vector.multi_reduction <maximumf>, %311, %cst_141 [1] : vector<4x5xf32> to vector<4xf32>
    %313 = vector.shape_cast %312 : vector<4xf32> to vector<4x1xf32>
    %314 = tpu.iota {dimensions = array<i32: 1>} : vector<4x5xi32>
    %315 = vector.broadcast %313 : vector<4x1xf32> to vector<4x5xf32>
    %316 = arith.cmpf oeq, %311, %315 : vector<4x5xf32>
    %c2147483647_i32 = arith.constant 2147483647 : i32
    %317 = vector.broadcast %c2147483647_i32 : i32 to vector<4x5xi32>
    %318 = arith.select %316, %314, %317 : vector<4x5xi1>, vector<4x5xi32>
    %cst_142 = arith.constant dense<2147483647> : vector<4xi32>
    %319 = vector.multi_reduction <minsi>, %318, %cst_142 [1] : vector<4x5xi32> to vector<4xi32>
    %320 = vector.shape_cast %319 : vector<4xi32> to vector<4x1xi32>
    %c0_143 = arith.constant 0 : index
    %c0_144 = arith.constant 0 : index
    %321 = vector.load %arg12[%c0_143, %c0_144] : memref<4x1xi32, #tpu.memory_space<vmem>>, vector<4x1xi32>
    tpu.vector_store %arg12[%c0_143, %c0_144], %320 {strides = array<i32>} : memref<4x1xi32, #tpu.memory_space<vmem>>, vector<4x1xi32>,
    return
  }
}

</mosaic_0001>

<llo_original>
// kernel: squeeze.1
$region0: #{squeeze.1}
  %s0 = inlined_call_operand.vmem [shape: f32[4], index: 0, kind: input, shape index: {}]
  %s1 = inlined_call_operand.hbm [shape: f32[2,2], index: 1, kind: output, shape index: {}]
  $region1: #{squeeze.1} parent=0
    #allocation0 [shape = 'u8[1024]{0}', space=vmem, size = 0x400, scoped, tag = 'operand span for operand 1']
    #allocation1 [shape = 's32[1]{0}', space=sflag, size = 0x4, scoped, tag = 'scoped memory for squeeze.1']
    #allocation2 [shape = 'u8[4096]{0}', space=vmem, size = 0x1000, scoped, tag = 'scoped mem for output reshape']
    #allocation3 [shape = 'u8[4096]{0}', space=vmem, size = 0x1000, scoped, tag = 'scoped mem for input reshape']
    %2 = vsyncpa [#allocation1], 0
    %s4 = ssub.s32 2, 1
    %v5 = vld [vmem:[%s0] sm:%s4]
    %6 = vst [vmem:[#allocation3] sm:%s4] %v5
    %v7 = vld [vmem:[#allocation3] sm:$0x1]
    %vm8 = vcmask 15360
    %9 = vst.msk [vmem:[#allocation2] sm:$0x1] %vm8, %v7
    %v10 = vld [vmem:[#allocation3] sm:$0x1]
    %11 = vrot.lane.b32.xlu0 %v10, 126
    %v12 = vpop.permute.xlu0 %11
    %vm13 = vcmask 15360
    %s14 = scalar_lea.vmem [#allocation2], 1
    %15 = vst.msk [vmem:[%s14] sm:$0x1] %vm13, %v12
    %s17 = ssub.s32 4, 1
    %v18 = vld [vmem:[#allocation2] sm:%s17]
    %s20 = ssub.s32 4, 1
    %21 = vst [vmem:[#allocation0] sm:%s20] %v18
    %23 = vsyncadd [#allocation1], 0
    %s25 = sshll.u32 [#allocation0], 4
    %s26 = int_to_ptr.vmem [resolvable:$true] %s25
    %s27 = sshll.u32 %s1, 4
    %s28 = int_to_ptr.hbm [resolvable:$true] %s27
    %30 = dma.vmem_to_hbm [thread:$0]  %s26, 32, %s28, [#allocation1]
    %32 = dma.done [#allocation1], 32
    %33 = vsyncpa [#allocation1], 1

// kernel: gridnet_forward.1
$region0: #{gridnet_forward.1}
  #allocation0 [shape = 'u32[]', space=smem, size = 0x4, offset = 0x4, fixed_abs, tag = 'smem constant byte address 0x4 - core index']
  #allocation1 [shape = 'u32[72,128]{1,0:T(1,128)}', space=vmem, size = 0x9000, scoped, tag = 'internal scratch']
  %s0 = inlined_call_operand.vmem [shape: f32[36,27], index: 0, kind: input, shape index: {}]
  %s1 = inlined_call_operand.vmem [shape: f32[2,27,128], index: 1, kind: input, shape index: {}]
  %s2 = inlined_call_operand.vmem [shape: f32[1,128], index: 2, kind: input, shape index: {}]
  %s3 = inlined_call_operand.vmem [shape: f32[2,64,96], index: 3, kind: input, shape index: {}]
  %s4 = inlined_call_operand.vmem [shape: f32[1,96], index: 4, kind: input, shape index: {}]
  %s5 = inlined_call_operand.vmem [shape: f32[2,96,128], index: 5, kind: input, shape index: {}]
  %s6 = inlined_call_operand.vmem [shape: f32[1,128], index: 6, kind: input, shape index: {}]
  %s7 = inlined_call_operand.vmem [shape: f32[2,128,32], index: 7, kind: input, shape index: {}]
  %s8 = inlined_call_operand.vmem [shape: f32[1,32], index: 8, kind: input, shape index: {}]
  %s9 = inlined_call_operand.vmem [shape: f32[32,6], index: 9, kind: input, shape index: {}]
  %s10 = inlined_call_operand.vmem [shape: f32[1,6], index: 10, kind: input, shape index: {}]
  %s11 = inlined_call_operand.vmem [shape: f32[4,6], index: 11, kind: output, shape index: {0}]
  %s12 = inlined_call_operand.vmem [shape: s32[4,1], index: 12, kind: output, shape index: {1}]
  %13 = xla_tuple %s11, %s12
  %s14 = sld [smem:[#allocation0]]
  $region62: #{gridnet_forward.1} parent=0
    _
  %s16 = ssub.s32 1, %s14
  %s17 = scalar_select 0, %s16, %s14
  // Predicated region
  $region2: #{gridnet_forward.1} parent=0 // pred_check
    _
  $region3: #{gridnet_forward.1} parent=0 // pred_check_branch
    %19 = sbr.rel (0) target = $region5
  $region4: #{gridnet_forward.1} parent=0 // pred_region
    _
  $region5: #{gridnet_forward.1} parent=0 // pred_fallthru
    _
  // Predicated region
  $region6: #{gridnet_forward.1} parent=0 // pred_check
    _
  $region7: #{gridnet_forward.1} parent=0 // pred_check_branch
    %21 = sbr.rel (0) target = $region9
  $region8: #{gridnet_forward.1} parent=0 // pred_region
    _
  $region9: #{gridnet_forward.1} parent=0 // pred_fallthru
    _
  // Predicated region
  $region10: #{gridnet_forward.1} parent=0 // pred_check
    _
  $region11: #{gridnet_forward.1} parent=0 // pred_check_branch
    %23 = sbr.rel (0) target = $region13
  $region12: #{gridnet_forward.1} parent=0 // pred_region
    _
  $region13: #{gridnet_forward.1} parent=0 // pred_fallthru
    _
  // Predicated region
  $region14: #{gridnet_forward.1} parent=0 // pred_check
    _
  $region15: #{gridnet_forward.1} parent=0 // pred_check_branch
    %25 = sbr.rel (0) target = $region17
  $region16: #{gridnet_forward.1} parent=0 // pred_region
    _
  $region17: #{gridnet_forward.1} parent=0 // pred_fallthru
    _
  // Predicated region
  $region18: #{gridnet_forward.1} parent=0 // pred_check
    _
  $region19: #{gridnet_forward.1} parent=0 // pred_check_branch
    %27 = sbr.rel (0) target = $region21
  $region20: #{gridnet_forward.1} parent=0 // pred_region
    _
  $region21: #{gridnet_forward.1} parent=0 // pred_fallthru
    _
  // Predicated region
  $region22: #{gridnet_forward.1} parent=0 // pred_check
    _
  $region23: #{gridnet_forward.1} parent=0 // pred_check_branch
    %29 = sbr.rel (0) target = $region25
  $region24: #{gridnet_forward.1} parent=0 // pred_region
    _
  $region25: #{gridnet_forward.1} parent=0 // pred_fallthru
    _
  // Predicated region
  $region26: #{gridnet_forward.1} parent=0 // pred_check
    _
  $region27: #{gridnet_forward.1} parent=0 // pred_check_branch
    %31 = sbr.rel (0) target = $region29
  $region28: #{gridnet_forward.1} parent=0 // pred_region
    _
  $region29: #{gridnet_forward.1} parent=0 // pred_fallthru
    _
  // Predicated region
  $region30: #{gridnet_forward.1} parent=0 // pred_check
    _
  $region31: #{gridnet_forward.1} parent=0 // pred_check_branch
    %33 = sbr.rel (0) target = $region33
  $region32: #{gridnet_forward.1} parent=0 // pred_region
    _
  $region33: #{gridnet_forward.1} parent=0 // pred_fallthru
    _
  // Predicated region
  $region34: #{gridnet_forward.1} parent=0 // pred_check
    _
  $region35: #{gridnet_forward.1} parent=0 // pred_check_branch
    %35 = sbr.rel (0) target = $region37
  $region36: #{gridnet_forward.1} parent=0 // pred_region
    _
  $region37: #{gridnet_forward.1} parent=0 // pred_fallthru
    _
  // Predicated region
  $region38: #{gridnet_forward.1} parent=0 // pred_check
    _
  $region39: #{gridnet_forward.1} parent=0 // pred_check_branch
    %37 = sbr.rel (0) target = $region41
  $region40: #{gridnet_forward.1} parent=0 // pred_region
    _
  $region41: #{gridnet_forward.1} parent=0 // pred_fallthru
    _
  // Predicated region
  $region42: #{gridnet_forward.1} parent=0 // pred_check
    _
  $region43: #{gridnet_forward.1} parent=0 // pred_check_branch
    %39 = sbr.rel (0) target = $region45
  $region44: #{gridnet_forward.1} parent=0 // pred_region
    _
  $region45: #{gridnet_forward.1} parent=0 // pred_fallthru
    _
  %v40 = vld [vmem:[%s1] sm:$0xff]
  %v41 = vld [vmem:[%s1 + $0x8] sm:$0xff]
  %v42 = vld [vmem:[%s1 + $0x10] sm:$0xff]
  %v43 = vld [vmem:[%s1 + $0x18] sm:$0x7]
  %s44 = scalar_lea.vmem %s1, 32
  %v45 = vld [vmem:[%s44] sm:$0xff]
  %v46 = vld [vmem:[%s44 + $0x8] sm:$0xff]
  %v47 = vld [vmem:[%s44 + $0x10] sm:$0xff]
  %v48 = vld [vmem:[%s44 + $0x18] sm:$0x7]
  %v49 = vld [vmem:[%s3] sm:$0xff]
  %v50 = vld [vmem:[%s3 + $0x8] sm:$0xff]
  %v51 = vld [vmem:[%s3 + $0x10] sm:$0xff]
  %v52 = vld [vmem:[%s3 + $0x18] sm:$0xff]
  %v53 = vld [vmem:[%s3 + $0x20] sm:$0xff]
  %v54 = vld [vmem:[%s3 + $0x28] sm:$0xff]
  %v55 = vld [vmem:[%s3 + $0x30] sm:$0xff]
  %v56 = vld [vmem:[%s3 + $0x38] sm:$0xff]
  %s57 = scalar_lea.vmem %s3, 64
  %v58 = vld [vmem:[%s57] sm:$0xff]
  %v59 = vld [vmem:[%s57 + $0x8] sm:$0xff]
  %v60 = vld [vmem:[%s57 + $0x10] sm:$0xff]
  %v61 = vld [vmem:[%s57 + $0x18] sm:$0xff]
  %v62 = vld [vmem:[%s57 + $0x20] sm:$0xff]
  %v63 = vld [vmem:[%s57 + $0x28] sm:$0xff]
  %v64 = vld [vmem:[%s57 + $0x30] sm:$0xff]
  %v65 = vld [vmem:[%s57 + $0x38] sm:$0xff]
  %v66 = vld [vmem:[%s5] sm:$0xff]
  %v67 = vld [vmem:[%s5 + $0x8] sm:$0xff]
  %v68 = vld [vmem:[%s5 + $0x10] sm:$0xff]
  %v69 = vld [vmem:[%s5 + $0x18] sm:$0xff]
  %v70 = vld [vmem:[%s5 + $0x20] sm:$0xff]
  %v71 = vld [vmem:[%s5 + $0x28] sm:$0xff]
  %v72 = vld [vmem:[%s5 + $0x30] sm:$0xff]
  %v73 = vld [vmem:[%s5 + $0x38] sm:$0xff]
  %v74 = vld [vmem:[%s5 + $0x40] sm:$0xff]
  %v75 = vld [vmem:[%s5 + $0x48] sm:$0xff]
  %v76 = vld [vmem:[%s5 + $0x50] sm:$0xff]
  %v77 = vld [vmem:[%s5 + $0x58] sm:$0xff]
  %s78 = scalar_lea.vmem %s5, 96
  %v79 = vld [vmem:[%s78] sm:$0xff]
  %v80 = vld [vmem:[%s78 + $0x8] sm:$0xff]
  %v81 = vld [vmem:[%s78 + $0x10] sm:$0xff]
  %v82 = vld [vmem:[%s78 + $0x18] sm:$0xff]
  %v83 = vld [vmem:[%s78 + $0x20] sm:$0xff]
  %v84 = vld [vmem:[%s78 + $0x28] sm:$0xff]
  %v85 = vld [vmem:[%s78 + $0x30] sm:$0xff]
  %v86 = vld [vmem:[%s78 + $0x38] sm:$0xff]
  %v87 = vld [vmem:[%s78 + $0x40] sm:$0xff]
  %v88 = vld [vmem:[%s78 + $0x48] sm:$0xff]
  %v89 = vld [vmem:[%s78 + $0x50] sm:$0xff]
  %v90 = vld [vmem:[%s78 + $0x58] sm:$0xff]
  %v91 = vld [vmem:[%s7] sm:$0xff]
  %v92 = vld [vmem:[%s7 + $0x8] sm:$0xff]
  %v93 = vld [vmem:[%s7 + $0x10] sm:$0xff]
  %v94 = vld [vmem:[%s7 + $0x18] sm:$0xff]
  %v95 = vld [vmem:[%s7 + $0x20] sm:$0xff]
  %v96 = vld [vmem:[%s7 + $0x28] sm:$0xff]
  %v97 = vld [vmem:[%s7 + $0x30] sm:$0xff]
  %v98 = vld [vmem:[%s7 + $0x38] sm:$0xff]
  %v99 = vld [vmem:[%s7 + $0x40] sm:$0xff]
  %v100 = vld [vmem:[%s7 + $0x48] sm:$0xff]
  %v101 = vld [vmem:[%s7 + $0x50] sm:$0xff]
  %v102 = vld [vmem:[%s7 + $0x58] sm:$0xff]
  %v103 = vld [vmem:[%s7 + $0x60] sm:$0xff]
  %v104 = vld [vmem:[%s7 + $0x68] sm:$0xff]
  %v105 = vld [vmem:[%s7 + $0x70] sm:$0xff]
  %v106 = vld [vmem:[%s7 + $0x78] sm:$0xff]
  %s107 = scalar_lea.vmem %s7, 128
  %v108 = vld [vmem:[%s107] sm:$0xff]
  %v109 = vld [vmem:[%s107 + $0x8] sm:$0xff]
  %v110 = vld [vmem:[%s107 + $0x10] sm:$0xff]
  %v111 = vld [vmem:[%s107 + $0x18] sm:$0xff]
  %v112 = vld [vmem:[%s107 + $0x20] sm:$0xff]
  %v113 = vld [vmem:[%s107 + $0x28] sm:$0xff]
  %v114 = vld [vmem:[%s107 + $0x30] sm:$0xff]
  %v115 = vld [vmem:[%s107 + $0x38] sm:$0xff]
  %v116 = vld [vmem:[%s107 + $0x40] sm:$0xff]
  %v117 = vld [vmem:[%s107 + $0x48] sm:$0xff]
  %v118 = vld [vmem:[%s107 + $0x50] sm:$0xff]
  %v119 = vld [vmem:[%s107 + $0x58] sm:$0xff]
  %v120 = vld [vmem:[%s107 + $0x60] sm:$0xff]
  %v121 = vld [vmem:[%s107 + $0x68] sm:$0xff]
  %v122 = vld [vmem:[%s107 + $0x70] sm:$0xff]
  %v123 = vld [vmem:[%s107 + $0x78] sm:$0xff]
  %v124 = vld [vmem:[%s2] sm:$0x1]
  %v125 = vld [vmem:[%s4] sm:$0x1]
  %v126 = vld [vmem:[%s6] sm:$0x1]
  %v127 = vld [vmem:[%s8] sm:$0x1]
  %v128 = vld [vmem:[%s9] sm:$0xff]
  %v129 = vld [vmem:[%s9 + $0x8] sm:$0xff]
  %v130 = vld [vmem:[%s9 + $0x10] sm:$0xff]
  %v131 = vld [vmem:[%s9 + $0x18] sm:$0xff]
  %v132 = vld [vmem:[%s10] sm:$0x1]
  %v133 = vld [vmem:[%s0] sm:$0xf]
  %v134 = vld [vmem:[%s0 + $0x5] sm:$0xf]
  %vm135 = vcmask 220160
  %v137 = vsel %vm135, %v134, 0
  %vm139 = vcmask 1042432
  %v141 = vsel %vm139, %v48, 0
  %143 = vmatpush.msra.mxu0 0.0
  %144 = vmatpush.msra.mxu0 0.0
  %145 = vmatpush.msra.mxu0 0.0
  %146 = vmatpush.msra.mxu0 0.0
  %147 = vmatpush.msra.mxu0 0.0
  %148 = vmatpush.msra.mxu0 0.0
  %149 = vmatpush.msra.mxu0 0.0
  %150 = vmatpush.msra.mxu0 0.0
  %151 = vmatpush.msra.mxu0 0.0
  %152 = vmatpush.msra.mxu0 0.0
  %153 = vmatpush.msra.mxu0 0.0
  %154 = vmatpush.msra.mxu0 0.0
  %155 = vmatpush.msra.mxu0 %v141
  %156 = vmatpush.msra.mxu0 %v47
  %157 = vmatpush.msra.mxu0 %v46
  %158 = vmatpush.msra.mxu0 %v45
  %159 = vmatmul.f32.gmra.mxu0 %v137
  %v160 = vpop.f32.mrf.mxu0
  %v161 = vadd.f32 0.0, %v160
  %162 = vdwg.mxu0
  %v164 = vsel %vm135, %v133, 0
  %v167 = vsel %vm139, %v43, 0
  %169 = vmatpush.msra.mxu0 0.0
  %170 = vmatpush.msra.mxu0 0.0
  %171 = vmatpush.msra.mxu0 0.0
  %172 = vmatpush.msra.mxu0 0.0
  %173 = vmatpush.msra.mxu0 0.0
  %174 = vmatpush.msra.mxu0 0.0
  %175 = vmatpush.msra.mxu0 0.0
  %176 = vmatpush.msra.mxu0 0.0
  %177 = vmatpush.msra.mxu0 0.0
  %178 = vmatpush.msra.mxu0 0.0
  %179 = vmatpush.msra.mxu0 0.0
  %180 = vmatpush.msra.mxu0 0.0
  %181 = vmatpush.msra.mxu0 %v167
  %182 = vmatpush.msra.mxu0 %v42
  %183 = vmatpush.msra.mxu0 %v41
  %184 = vmatpush.msra.mxu0 %v40
  %185 = vmatmul.f32.gmra.mxu0 %v164
  %v186 = vpop.f32.mrf.mxu0
  %v187 = vadd.f32 %v161, %v186
  %188 = vdwg.mxu0
  %v190 = vperm.slane %v124, 0
  %v192 = vadd.f32 %v187, %v190
  %vm193 = vcmp.gt.f32.partialorder %v192, 0.0
  %v194 = vmin.f32 %v192, 0.0
  %v195 = vmul.f32 %v194, 1.442695
  %v196 = vpow.pop %v195
  %v197 = vsub.f32 %v196, 1.0
  %v198 = vsel %vm193, %v192, %v197
  %v199 = vld [vmem:[%s0 + $0x1] sm:$0xf]
  %v201 = vsel %vm135, %v199, 0
  %203 = vmatpush.msra.mxu0 0.0
  %204 = vmatpush.msra.mxu0 0.0
  %205 = vmatpush.msra.mxu0 0.0
  %206 = vmatpush.msra.mxu0 0.0
  %207 = vmatpush.msra.mxu0 0.0
  %208 = vmatpush.msra.mxu0 0.0
  %209 = vmatpush.msra.mxu0 0.0
  %210 = vmatpush.msra.mxu0 0.0
  %211 = vmatpush.msra.mxu0 0.0
  %212 = vmatpush.msra.mxu0 0.0
  %213 = vmatpush.msra.mxu0 0.0
  %214 = vmatpush.msra.mxu0 0.0
  %215 = vmatpush.msra.mxu0 %v141
  %216 = vmatpush.msra.mxu0 %v47
  %217 = vmatpush.msra.mxu0 %v46
  %218 = vmatpush.msra.mxu0 %v45
  %219 = vmatmul.f32.gmra.mxu0 %v201
  %v220 = vpop.f32.mrf.mxu0
  %v221 = vadd.f32 0.0, %v220
  %222 = vdwg.mxu0
  %223 = vmatpush.msra.mxu0 0.0
  %224 = vmatpush.msra.mxu0 0.0
  %225 = vmatpush.msra.mxu0 0.0
  %226 = vmatpush.msra.mxu0 0.0
  %227 = vmatpush.msra.mxu0 0.0
  %228 = vmatpush.msra.mxu0 0.0
  %229 = vmatpush.msra.mxu0 0.0
  %230 = vmatpush.msra.mxu0 0.0
  %231 = vmatpush.msra.mxu0 0.0
  %232 = vmatpush.msra.mxu0 0.0
  %233 = vmatpush.msra.mxu0 0.0
  %234 = vmatpush.msra.mxu0 0.0
  %235 = vmatpush.msra.mxu0 %v167
  %236 = vmatpush.msra.mxu0 %v42
  %237 = vmatpush.msra.mxu0 %v41
  %238 = vmatpush.msra.mxu0 %v40
  %239 = vmatmul.f32.gmra.mxu0 %v137
  %v240 = vpop.f32.mrf.mxu0
  %v241 = vadd.f32 %v221, %v240
  %242 = vdwg.mxu0
  %v243 = vadd.f32 %v241, %v190
  %vm244 = vcmp.gt.f32.partialorder %v243, 0.0
  %v245 = vmin.f32 %v243, 0.0
  %v246 = vmul.f32 %v245, 1.442695
  %v247 = vpow.pop %v246
  %v248 = vsub.f32 %v247, 1.0
  %v249 = vsel %vm244, %v243, %v248
  %251 = vrot.lane.b32.xlu0 %v198, 64
  %v252 = vpop.permute.xlu0 %251
  %v254 = vmax.f32 %v198, %v252
  %256 = vrot.lane.b32.xlu0 %v249, 64
  %v257 = vpop.permute.xlu0 %256
  %v259 = vmax.f32 %v249, %v257
  %v260 = vmax.f32 %v254, %v259
  %v262 = vrot.slane %v260, 1
  %vm263 = vcmask 523264
  %v264 = vsel %vm263, %v262, 0
  %266 = vmatpush.msra.mxu0 0.0
  %267 = vmatpush.msra.mxu0 0.0
  %268 = vmatpush.msra.mxu0 0.0
  %269 = vmatpush.msra.mxu0 0.0
  %270 = vmatpush.msra.mxu0 0.0
  %271 = vmatpush.msra.mxu0 0.0
  %272 = vmatpush.msra.mxu0 0.0
  %273 = vmatpush.msra.mxu0 0.0
  %274 = vmatpush.msra.mxu0 %v65
  %275 = vmatpush.msra.mxu0 %v64
  %276 = vmatpush.msra.mxu0 %v63
  %277 = vmatpush.msra.mxu0 %v62
  %278 = vmatpush.msra.mxu0 %v61
  %279 = vmatpush.msra.mxu0 %v60
  %280 = vmatpush.msra.mxu0 %v59
  %281 = vmatpush.msra.mxu0 %v58
  %282 = vmatmul.f32.gmra.mxu0 %v264
  %v283 = vpop.f32.mrf.mxu0
  %v284 = vadd.f32 0.0, %v283
  %285 = vdwg.mxu0
  %v286 = vsel %vm263, %v260, 0
  %288 = vmatpush.msra.mxu0 0.0
  %289 = vmatpush.msra.mxu0 0.0
  %290 = vmatpush.msra.mxu0 0.0
  %291 = vmatpush.msra.mxu0 0.0
  %292 = vmatpush.msra.mxu0 0.0
  %293 = vmatpush.msra.mxu0 0.0
  %294 = vmatpush.msra.mxu0 0.0
  %295 = vmatpush.msra.mxu0 0.0
  %296 = vmatpush.msra.mxu0 %v56
  %297 = vmatpush.msra.mxu0 %v55
  %298 = vmatpush.msra.mxu0 %v54
  %299 = vmatpush.msra.mxu0 %v53
  %300 = vmatpush.msra.mxu0 %v52
  %301 = vmatpush.msra.mxu0 %v51
  %302 = vmatpush.msra.mxu0 %v50
  %303 = vmatpush.msra.mxu0 %v49
  %304 = vmatmul.f32.gmra.mxu0 %v286
  %v305 = vpop.f32.mrf.mxu0
  %v306 = vadd.f32 %v284, %v305
  %307 = vdwg.mxu0
  %v309 = vperm.slane %v125, 0
  %v311 = vadd.f32 %v306, %v309
  %vm312 = vcmp.gt.f32.partialorder %v311, 0.0
  %v313 = vmin.f32 %v311, 0.0
  %v314 = vmul.f32 %v313, 1.442695
  %v315 = vpow.pop %v314
  %v316 = vsub.f32 %v315, 1.0
  %v317 = vsel %vm312, %v311, %v316
  %v319 = vrot.slane %v317, 1
  %vm320 = vcmask 785408
  %v321 = vsel %vm320, %v319, 0
  %323 = vmatpush.msra.mxu0 0.0
  %324 = vmatpush.msra.mxu0 0.0
  %325 = vmatpush.msra.mxu0 0.0
  %326 = vmatpush.msra.mxu0 0.0
  %327 = vmatpush.msra.mxu0 %v90
  %328 = vmatpush.msra.mxu0 %v89
  %329 = vmatpush.msra.mxu0 %v88
  %330 = vmatpush.msra.mxu0 %v87
  %331 = vmatpush.msra.mxu0 %v86
  %332 = vmatpush.msra.mxu0 %v85
  %333 = vmatpush.msra.mxu0 %v84
  %334 = vmatpush.msra.mxu0 %v83
  %335 = vmatpush.msra.mxu0 %v82
  %336 = vmatpush.msra.mxu0 %v81
  %337 = vmatpush.msra.mxu0 %v80
  %338 = vmatpush.msra.mxu0 %v79
  %339 = vmatmul.f32.gmra.mxu0 %v321
  %v340 = vpop.f32.mrf.mxu0
  %v341 = vadd.f32 0.0, %v340
  %342 = vdwg.mxu0
  %v343 = vsel %vm320, %v317, 0
  %345 = vmatpush.msra.mxu0 0.0
  %346 = vmatpush.msra.mxu0 0.0
  %347 = vmatpush.msra.mxu0 0.0
  %348 = vmatpush.msra.mxu0 0.0
  %349 = vmatpush.msra.mxu0 %v77
  %350 = vmatpush.msra.mxu0 %v76
  %351 = vmatpush.msra.mxu0 %v75
  %352 = vmatpush.msra.mxu0 %v74
  %353 = vmatpush.msra.mxu0 %v73
  %354 = vmatpush.msra.mxu0 %v72
  %355 = vmatpush.msra.mxu0 %v71
  %356 = vmatpush.msra.mxu0 %v70
  %357 = vmatpush.msra.mxu0 %v69
  %358 = vmatpush.msra.mxu0 %v68
  %359 = vmatpush.msra.mxu0 %v67
  %360 = vmatpush.msra.mxu0 %v66
  %361 = vmatmul.f32.gmra.mxu0 %v343
  %v362 = vpop.f32.mrf.mxu0
  %v363 = vadd.f32 %v341, %v362
  %364 = vdwg.mxu0
  %v366 = vperm.slane %v126, 0
  %v368 = vadd.f32 %v363, %v366
  %vm369 = vcmp.gt.f32.partialorder %v368, 0.0
  %v370 = vmin.f32 %v368, 0.0
  %v371 = vmul.f32 %v370, 1.442695
  %v372 = vpow.pop %v371
  %v373 = vsub.f32 %v372, 1.0
  %v374 = vsel %vm369, %v368, %v373
  %v375 = vld [vmem:[%s0 + $0x9] sm:$0xf]
  %v376 = vld [vmem:[%s0 + $0xe] sm:$0xf]
  %v378 = vsel %vm135, %v376, 0
  %380 = vmatpush.msra.mxu0 0.0
  %381 = vmatpush.msra.mxu0 0.0
  %382 = vmatpush.msra.mxu0 0.0
  %383 = vmatpush.msra.mxu0 0.0
  %384 = vmatpush.msra.mxu0 0.0
  %385 = vmatpush.msra.mxu0 0.0
  %386 = vmatpush.msra.mxu0 0.0
  %387 = vmatpush.msra.mxu0 0.0
  %388 = vmatpush.msra.mxu0 0.0
  %389 = vmatpush.msra.mxu0 0.0
  %390 = vmatpush.msra.mxu0 0.0
  %391 = vmatpush.msra.mxu0 0.0
  %392 = vmatpush.msra.mxu0 %v141
  %393 = vmatpush.msra.mxu0 %v47
  %394 = vmatpush.msra.mxu0 %v46
  %395 = vmatpush.msra.mxu0 %v45
  %396 = vmatmul.f32.gmra.mxu0 %v378
  %v397 = vpop.f32.mrf.mxu0
  %v398 = vadd.f32 0.0, %v397
  %399 = vdwg.mxu0
  %v401 = vsel %vm135, %v375, 0
  %403 = vmatpush.msra.mxu0 0.0
  %404 = vmatpush.msra.mxu0 0.0
  %405 = vmatpush.msra.mxu0 0.0
  %406 = vmatpush.msra.mxu0 0.0
  %407 = vmatpush.msra.mxu0 0.0
  %408 = vmatpush.msra.mxu0 0.0
  %409 = vmatpush.msra.mxu0 0.0
  %410 = vmatpush.msra.mxu0 0.0
  %411 = vmatpush.msra.mxu0 0.0
  %412 = vmatpush.msra.mxu0 0.0
  %413 = vmatpush.msra.mxu0 0.0
  %414 = vmatpush.msra.mxu0 0.0
  %415 = vmatpush.msra.mxu0 %v167
  %416 = vmatpush.msra.mxu0 %v42
  %417 = vmatpush.msra.mxu0 %v41
  %418 = vmatpush.msra.mxu0 %v40
  %419 = vmatmul.f32.gmra.mxu0 %v401
  %v420 = vpop.f32.mrf.mxu0
  %v421 = vadd.f32 %v398, %v420
  %422 = vdwg.mxu0
  %v423 = vadd.f32 %v421, %v190
  %vm424 = vcmp.gt.f32.partialorder %v423, 0.0
  %v425 = vmin.f32 %v423, 0.0
  %v426 = vmul.f32 %v425, 1.442695
  %v427 = vpow.pop %v426
  %v428 = vsub.f32 %v427, 1.0
  %v429 = vsel %vm424, %v423, %v428
  %v430 = vld [vmem:[%s0 + $0xa] sm:$0xf]
  %v432 = vsel %vm135, %v430, 0
  %434 = vmatpush.msra.mxu0 0.0
  %435 = vmatpush.msra.mxu0 0.0
  %436 = vmatpush.msra.mxu0 0.0
  %437 = vmatpush.msra.mxu0 0.0
  %438 = vmatpush.msra.mxu0 0.0
  %439 = vmatpush.msra.mxu0 0.0
  %440 = vmatpush.msra.mxu0 0.0
  %441 = vmatpush.msra.mxu0 0.0
  %442 = vmatpush.msra.mxu0 0.0
  %443 = vmatpush.msra.mxu0 0.0
  %444 = vmatpush.msra.mxu0 0.0
  %445 = vmatpush.msra.mxu0 0.0
  %446 = vmatpush.msra.mxu0 %v141
  %447 = vmatpush.msra.mxu0 %v47
  %448 = vmatpush.msra.mxu0 %v46
  %449 = vmatpush.msra.mxu0 %v45
  %450 = vmatmul.f32.gmra.mxu0 %v432
  %v451 = vpop.f32.mrf.mxu0
  %v452 = vadd.f32 0.0, %v451
  %453 = vdwg.mxu0
  %454 = vmatpush.msra.mxu0 0.0
  %455 = vmatpush.msra.mxu0 0.0
  %456 = vmatpush.msra.mxu0 0.0
  %457 = vmatpush.msra.mxu0 0.0
  %458 = vmatpush.msra.mxu0 0.0
  %459 = vmatpush.msra.mxu0 0.0
  %460 = vmatpush.msra.mxu0 0.0
  %461 = vmatpush.msra.mxu0 0.0
  %462 = vmatpush.msra.mxu0 0.0
  %463 = vmatpush.msra.mxu0 0.0
  %464 = vmatpush.msra.mxu0 0.0
  %465 = vmatpush.msra.mxu0 0.0
  %466 = vmatpush.msra.mxu0 %v167
  %467 = vmatpush.msra.mxu0 %v42
  %468 = vmatpush.msra.mxu0 %v41
  %469 = vmatpush.msra.mxu0 %v40
  %470 = vmatmul.f32.gmra.mxu0 %v378
  %v471 = vpop.f32.mrf.mxu0
  %v472 = vadd.f32 %v452, %v471
  %473 = vdwg.mxu0
  %v474 = vadd.f32 %v472, %v190
  %vm475 = vcmp.gt.f32.partialorder %v474, 0.0
  %v476 = vmin.f32 %v474, 0.0
  %v477 = vmul.f32 %v476, 1.442695
  %v478 = vpow.pop %v477
  %v479 = vsub.f32 %v478, 1.0
  %v480 = vsel %vm475, %v474, %v479
  %482 = vrot.lane.b32.xlu0 %v429, 64
  %v483 = vpop.permute.xlu0 %482
  %v485 = vmax.f32 %v429, %v483
  %487 = vrot.lane.b32.xlu0 %v480, 64
  %v488 = vpop.permute.xlu0 %487
  %v490 = vmax.f32 %v480, %v488
  %v491 = vmax.f32 %v485, %v490
  %v493 = vrot.slane %v491, 1
  %v494 = vsel %vm263, %v493, 0
  %496 = vmatpush.msra.mxu0 0.0
  %497 = vmatpush.msra.mxu0 0.0
  %498 = vmatpush.msra.mxu0 0.0
  %499 = vmatpush.msra.mxu0 0.0
  %500 = vmatpush.msra.mxu0 0.0
  %501 = vmatpush.msra.mxu0 0.0
  %502 = vmatpush.msra.mxu0 0.0
  %503 = vmatpush.msra.mxu0 0.0
  %504 = vmatpush.msra.mxu0 %v65
  %505 = vmatpush.msra.mxu0 %v64
  %506 = vmatpush.msra.mxu0 %v63
  %507 = vmatpush.msra.mxu0 %v62
  %508 = vmatpush.msra.mxu0 %v61
  %509 = vmatpush.msra.mxu0 %v60
  %510 = vmatpush.msra.mxu0 %v59
  %511 = vmatpush.msra.mxu0 %v58
  %512 = vmatmul.f32.gmra.mxu0 %v494
  %v513 = vpop.f32.mrf.mxu0
  %v514 = vadd.f32 0.0, %v513
  %515 = vdwg.mxu0
  %v516 = vsel %vm263, %v491, 0
  %518 = vmatpush.msra.mxu0 0.0
  %519 = vmatpush.msra.mxu0 0.0
  %520 = vmatpush.msra.mxu0 0.0
  %521 = vmatpush.msra.mxu0 0.0
  %522 = vmatpush.msra.mxu0 0.0
  %523 = vmatpush.msra.mxu0 0.0
  %524 = vmatpush.msra.mxu0 0.0
  %525 = vmatpush.msra.mxu0 0.0
  %526 = vmatpush.msra.mxu0 %v56
  %527 = vmatpush.msra.mxu0 %v55
  %528 = vmatpush.msra.mxu0 %v54
  %529 = vmatpush.msra.mxu0 %v53
  %530 = vmatpush.msra.mxu0 %v52
  %531 = vmatpush.msra.mxu0 %v51
  %532 = vmatpush.msra.mxu0 %v50
  %533 = vmatpush.msra.mxu0 %v49
  %534 = vmatmul.f32.gmra.mxu0 %v516
  %v535 = vpop.f32.mrf.mxu0
  %v536 = vadd.f32 %v514, %v535
  %537 = vdwg.mxu0
  %v538 = vadd.f32 %v536, %v309
  %vm539 = vcmp.gt.f32.partialorder %v538, 0.0
  %v540 = vmin.f32 %v538, 0.0
  %v541 = vmul.f32 %v540, 1.442695
  %v542 = vpow.pop %v541
  %v543 = vsub.f32 %v542, 1.0
  %v544 = vsel %vm539, %v538, %v543
  %v546 = vrot.slane %v544, 1
  %v547 = vsel %vm320, %v546, 0
  %549 = vmatpush.msra.mxu0 0.0
  %550 = vmatpush.msra.mxu0 0.0
  %551 = vmatpush.msra.mxu0 0.0
  %552 = vmatpush.msra.mxu0 0.0
  %553 = vmatpush.msra.mxu0 %v90
  %554 = vmatpush.msra.mxu0 %v89
  %555 = vmatpush.msra.mxu0 %v88
  %556 = vmatpush.msra.mxu0 %v87
  %557 = vmatpush.msra.mxu0 %v86
  %558 = vmatpush.msra.mxu0 %v85
  %559 = vmatpush.msra.mxu0 %v84
  %560 = vmatpush.msra.mxu0 %v83
  %561 = vmatpush.msra.mxu0 %v82
  %562 = vmatpush.msra.mxu0 %v81
  %563 = vmatpush.msra.mxu0 %v80
  %564 = vmatpush.msra.mxu0 %v79
  %565 = vmatmul.f32.gmra.mxu0 %v547
  %v566 = vpop.f32.mrf.mxu0
  %v567 = vadd.f32 0.0, %v566
  %568 = vdwg.mxu0
  %v569 = vsel %vm320, %v544, 0
  %571 = vmatpush.msra.mxu0 0.0
  %572 = vmatpush.msra.mxu0 0.0
  %573 = vmatpush.msra.mxu0 0.0
  %574 = vmatpush.msra.mxu0 0.0
  %575 = vmatpush.msra.mxu0 %v77
  %576 = vmatpush.msra.mxu0 %v76
  %577 = vmatpush.msra.mxu0 %v75
  %578 = vmatpush.msra.mxu0 %v74
  %579 = vmatpush.msra.mxu0 %v73
  %580 = vmatpush.msra.mxu0 %v72
  %581 = vmatpush.msra.mxu0 %v71
  %582 = vmatpush.msra.mxu0 %v70
  %583 = vmatpush.msra.mxu0 %v69
  %584 = vmatpush.msra.mxu0 %v68
  %585 = vmatpush.msra.mxu0 %v67
  %586 = vmatpush.msra.mxu0 %v66
  %587 = vmatmul.f32.gmra.mxu0 %v569
  %v588 = vpop.f32.mrf.mxu0
  %v589 = vadd.f32 %v567, %v588
  %590 = vdwg.mxu0
  %v591 = vadd.f32 %v589, %v366
  %vm592 = vcmp.gt.f32.partialorder %v591, 0.0
  %v593 = vmin.f32 %v591, 0.0
  %v594 = vmul.f32 %v593, 1.442695
  %v595 = vpow.pop %v594
  %v596 = vsub.f32 %v595, 1.0
  %v597 = vsel %vm592, %v591, %v596
  %v598 = vld [vmem:[%s0 + $0x12] sm:$0xf]
  %v599 = vld [vmem:[%s0 + $0x17] sm:$0xf]
  %v601 = vsel %vm135, %v599, 0
  %603 = vmatpush.msra.mxu0 0.0
  %604 = vmatpush.msra.mxu0 0.0
  %605 = vmatpush.msra.mxu0 0.0
  %606 = vmatpush.msra.mxu0 0.0
  %607 = vmatpush.msra.mxu0 0.0
  %608 = vmatpush.msra.mxu0 0.0
  %609 = vmatpush.msra.mxu0 0.0
  %610 = vmatpush.msra.mxu0 0.0
  %611 = vmatpush.msra.mxu0 0.0
  %612 = vmatpush.msra.mxu0 0.0
  %613 = vmatpush.msra.mxu0 0.0
  %614 = vmatpush.msra.mxu0 0.0
  %615 = vmatpush.msra.mxu0 %v141
  %616 = vmatpush.msra.mxu0 %v47
  %617 = vmatpush.msra.mxu0 %v46
  %618 = vmatpush.msra.mxu0 %v45
  %619 = vmatmul.f32.gmra.mxu0 %v601
  %v620 = vpop.f32.mrf.mxu0
  %v621 = vadd.f32 0.0, %v620
  %622 = vdwg.mxu0
  %v624 = vsel %vm135, %v598, 0
  %626 = vmatpush.msra.mxu0 0.0
  %627 = vmatpush.msra.mxu0 0.0
  %628 = vmatpush.msra.mxu0 0.0
  %629 = vmatpush.msra.mxu0 0.0
  %630 = vmatpush.msra.mxu0 0.0
  %631 = vmatpush.msra.mxu0 0.0
  %632 = vmatpush.msra.mxu0 0.0
  %633 = vmatpush.msra.mxu0 0.0
  %634 = vmatpush.msra.mxu0 0.0
  %635 = vmatpush.msra.mxu0 0.0
  %636 = vmatpush.msra.mxu0 0.0
  %637 = vmatpush.msra.mxu0 0.0
  %638 = vmatpush.msra.mxu0 %v167
  %639 = vmatpush.msra.mxu0 %v42
  %640 = vmatpush.msra.mxu0 %v41
  %641 = vmatpush.msra.mxu0 %v40
  %642 = vmatmul.f32.gmra.mxu0 %v624
  %v643 = vpop.f32.mrf.mxu0
  %v644 = vadd.f32 %v621, %v643
  %645 = vdwg.mxu0
  %v646 = vadd.f32 %v644, %v190
  %vm647 = vcmp.gt.f32.partialorder %v646, 0.0
  %v648 = vmin.f32 %v646, 0.0
  %v649 = vmul.f32 %v648, 1.442695
  %v650 = vpow.pop %v649
  %v651 = vsub.f32 %v650, 1.0
  %v652 = vsel %vm647, %v646, %v651
  %v653 = vld [vmem:[%s0 + $0x13] sm:$0xf]
  %v655 = vsel %vm135, %v653, 0
  %657 = vmatpush.msra.mxu0 0.0
  %658 = vmatpush.msra.mxu0 0.0
  %659 = vmatpush.msra.mxu0 0.0
  %660 = vmatpush.msra.mxu0 0.0
  %661 = vmatpush.msra.mxu0 0.0
  %662 = vmatpush.msra.mxu0 0.0
  %663 = vmatpush.msra.mxu0 0.0
  %664 = vmatpush.msra.mxu0 0.0
  %665 = vmatpush.msra.mxu0 0.0
  %666 = vmatpush.msra.mxu0 0.0
  %667 = vmatpush.msra.mxu0 0.0
  %668 = vmatpush.msra.mxu0 0.0
  %669 = vmatpush.msra.mxu0 %v141
  %670 = vmatpush.msra.mxu0 %v47
  %671 = vmatpush.msra.mxu0 %v46
  %672 = vmatpush.msra.mxu0 %v45
  %673 = vmatmul.f32.gmra.mxu0 %v655
  %v674 = vpop.f32.mrf.mxu0
  %v675 = vadd.f32 0.0, %v674
  %676 = vdwg.mxu0
  %677 = vmatpush.msra.mxu0 0.0
  %678 = vmatpush.msra.mxu0 0.0
  %679 = vmatpush.msra.mxu0 0.0
  %680 = vmatpush.msra.mxu0 0.0
  %681 = vmatpush.msra.mxu0 0.0
  %682 = vmatpush.msra.mxu0 0.0
  %683 = vmatpush.msra.mxu0 0.0
  %684 = vmatpush.msra.mxu0 0.0
  %685 = vmatpush.msra.mxu0 0.0
  %686 = vmatpush.msra.mxu0 0.0
  %687 = vmatpush.msra.mxu0 0.0
  %688 = vmatpush.msra.mxu0 0.0
  %689 = vmatpush.msra.mxu0 %v167
  %690 = vmatpush.msra.mxu0 %v42
  %691 = vmatpush.msra.mxu0 %v41
  %692 = vmatpush.msra.mxu0 %v40
  %693 = vmatmul.f32.gmra.mxu0 %v601
  %v694 = vpop.f32.mrf.mxu0
  %v695 = vadd.f32 %v675, %v694
  %696 = vdwg.mxu0
  %v697 = vadd.f32 %v695, %v190
  %vm698 = vcmp.gt.f32.partialorder %v697, 0.0
  %v699 = vmin.f32 %v697, 0.0
  %v700 = vmul.f32 %v699, 1.442695
  %v701 = vpow.pop %v700
  %v702 = vsub.f32 %v701, 1.0
  %v703 = vsel %vm698, %v697, %v702
  %705 = vrot.lane.b32.xlu0 %v652, 64
  %v706 = vpop.permute.xlu0 %705
  %v708 = vmax.f32 %v652, %v706
  %710 = vrot.lane.b32.xlu0 %v703, 64
  %v711 = vpop.permute.xlu0 %710
  %v713 = vmax.f32 %v703, %v711
  %v714 = vmax.f32 %v708, %v713
  %v716 = vrot.slane %v714, 1
  %v717 = vsel %vm263, %v716, 0
  %719 = vmatpush.msra.mxu0 0.0
  %720 = vmatpush.msra.mxu0 0.0
  %721 = vmatpush.msra.mxu0 0.0
  %722 = vmatpush.msra.mxu0 0.0
  %723 = vmatpush.msra.mxu0 0.0
  %724 = vmatpush.msra.mxu0 0.0
  %725 = vmatpush.msra.mxu0 0.0
  %726 = vmatpush.msra.mxu0 0.0
  %727 = vmatpush.msra.mxu0 %v65
  %728 = vmatpush.msra.mxu0 %v64
  %729 = vmatpush.msra.mxu0 %v63
  %730 = vmatpush.msra.mxu0 %v62
  %731 = vmatpush.msra.mxu0 %v61
  %732 = vmatpush.msra.mxu0 %v60
  %733 = vmatpush.msra.mxu0 %v59
  %734 = vmatpush.msra.mxu0 %v58
  %735 = vmatmul.f32.gmra.mxu0 %v717
  %v736 = vpop.f32.mrf.mxu0
  %v737 = vadd.f32 0.0, %v736
  %738 = vdwg.mxu0
  %v739 = vsel %vm263, %v714, 0
  %741 = vmatpush.msra.mxu0 0.0
  %742 = vmatpush.msra.mxu0 0.0
  %743 = vmatpush.msra.mxu0 0.0
  %744 = vmatpush.msra.mxu0 0.0
  %745 = vmatpush.msra.mxu0 0.0
  %746 = vmatpush.msra.mxu0 0.0
  %747 = vmatpush.msra.mxu0 0.0
  %748 = vmatpush.msra.mxu0 0.0
  %749 = vmatpush.msra.mxu0 %v56
  %750 = vmatpush.msra.mxu0 %v55
  %751 = vmatpush.msra.mxu0 %v54
  %752 = vmatpush.msra.mxu0 %v53
  %753 = vmatpush.msra.mxu0 %v52
  %754 = vmatpush.msra.mxu0 %v51
  %755 = vmatpush.msra.mxu0 %v50
  %756 = vmatpush.msra.mxu0 %v49
  %757 = vmatmul.f32.gmra.mxu0 %v739
  %v758 = vpop.f32.mrf.mxu0
  %v759 = vadd.f32 %v737, %v758
  %760 = vdwg.mxu0
  %v761 = vadd.f32 %v759, %v309
  %vm762 = vcmp.gt.f32.partialorder %v761, 0.0
  %v763 = vmin.f32 %v761, 0.0
  %v764 = vmul.f32 %v763, 1.442695
  %v765 = vpow.pop %v764
  %v766 = vsub.f32 %v765, 1.0
  %v767 = vsel %vm762, %v761, %v766
  %v769 = vrot.slane %v767, 1
  %v770 = vsel %vm320, %v769, 0
  %772 = vmatpush.msra.mxu0 0.0
  %773 = vmatpush.msra.mxu0 0.0
  %774 = vmatpush.msra.mxu0 0.0
  %775 = vmatpush.msra.mxu0 0.0
  %776 = vmatpush.msra.mxu0 %v90
  %777 = vmatpush.msra.mxu0 %v89
  %778 = vmatpush.msra.mxu0 %v88
  %779 = vmatpush.msra.mxu0 %v87
  %780 = vmatpush.msra.mxu0 %v86
  %781 = vmatpush.msra.mxu0 %v85
  %782 = vmatpush.msra.mxu0 %v84
  %783 = vmatpush.msra.mxu0 %v83
  %784 = vmatpush.msra.mxu0 %v82
  %785 = vmatpush.msra.mxu0 %v81
  %786 = vmatpush.msra.mxu0 %v80
  %787 = vmatpush.msra.mxu0 %v79
  %788 = vmatmul.f32.gmra.mxu0 %v770
  %v789 = vpop.f32.mrf.mxu0
  %v790 = vadd.f32 0.0, %v789
  %791 = vdwg.mxu0
  %v792 = vsel %vm320, %v767, 0
  %794 = vmatpush.msra.mxu0 0.0
  %795 = vmatpush.msra.mxu0 0.0
  %796 = vmatpush.msra.mxu0 0.0
  %797 = vmatpush.msra.mxu0 0.0
  %798 = vmatpush.msra.mxu0 %v77
  %799 = vmatpush.msra.mxu0 %v76
  %800 = vmatpush.msra.mxu0 %v75
  %801 = vmatpush.msra.mxu0 %v74
  %802 = vmatpush.msra.mxu0 %v73
  %803 = vmatpush.msra.mxu0 %v72
  %804 = vmatpush.msra.mxu0 %v71
  %805 = vmatpush.msra.mxu0 %v70
  %806 = vmatpush.msra.mxu0 %v69
  %807 = vmatpush.msra.mxu0 %v68
  %808 = vmatpush.msra.mxu0 %v67
  %809 = vmatpush.msra.mxu0 %v66
  %810 = vmatmul.f32.gmra.mxu0 %v792
  %v811 = vpop.f32.mrf.mxu0
  %v812 = vadd.f32 %v790, %v811
  %813 = vdwg.mxu0
  %v814 = vadd.f32 %v812, %v366
  %vm815 = vcmp.gt.f32.partialorder %v814, 0.0
  %v816 = vmin.f32 %v814, 0.0
  %v817 = vmul.f32 %v816, 1.442695
  %v818 = vpow.pop %v817
  %v819 = vsub.f32 %v818, 1.0
  %v820 = vsel %vm815, %v814, %v819
  %v821 = vld [vmem:[%s0 + $0x1b] sm:$0xf]
  %v822 = vld [vmem:[%s0 + $0x20] sm:$0xf]
  %v824 = vsel %vm135, %v822, 0
  %826 = vmatpush.msra.mxu0 0.0
  %827 = vmatpush.msra.mxu0 0.0
  %828 = vmatpush.msra.mxu0 0.0
  %829 = vmatpush.msra.mxu0 0.0
  %830 = vmatpush.msra.mxu0 0.0
  %831 = vmatpush.msra.mxu0 0.0
  %832 = vmatpush.msra.mxu0 0.0
  %833 = vmatpush.msra.mxu0 0.0
  %834 = vmatpush.msra.mxu0 0.0
  %835 = vmatpush.msra.mxu0 0.0
  %836 = vmatpush.msra.mxu0 0.0
  %837 = vmatpush.msra.mxu0 0.0
  %838 = vmatpush.msra.mxu0 %v141
  %839 = vmatpush.msra.mxu0 %v47
  %840 = vmatpush.msra.mxu0 %v46
  %841 = vmatpush.msra.mxu0 %v45
  %842 = vmatmul.f32.gmra.mxu0 %v824
  %v843 = vpop.f32.mrf.mxu0
  %v844 = vadd.f32 0.0, %v843
  %845 = vdwg.mxu0
  %v847 = vsel %vm135, %v821, 0
  %849 = vmatpush.msra.mxu0 0.0
  %850 = vmatpush.msra.mxu0 0.0
  %851 = vmatpush.msra.mxu0 0.0
  %852 = vmatpush.msra.mxu0 0.0
  %853 = vmatpush.msra.mxu0 0.0
  %854 = vmatpush.msra.mxu0 0.0
  %855 = vmatpush.msra.mxu0 0.0
  %856 = vmatpush.msra.mxu0 0.0
  %857 = vmatpush.msra.mxu0 0.0
  %858 = vmatpush.msra.mxu0 0.0
  %859 = vmatpush.msra.mxu0 0.0
  %860 = vmatpush.msra.mxu0 0.0
  %861 = vmatpush.msra.mxu0 %v167
  %862 = vmatpush.msra.mxu0 %v42
  %863 = vmatpush.msra.mxu0 %v41
  %864 = vmatpush.msra.mxu0 %v40
  %865 = vmatmul.f32.gmra.mxu0 %v847
  %v866 = vpop.f32.mrf.mxu0
  %v867 = vadd.f32 %v844, %v866
  %868 = vdwg.mxu0
  %v869 = vadd.f32 %v867, %v190
  %vm870 = vcmp.gt.f32.partialorder %v869, 0.0
  %v871 = vmin.f32 %v869, 0.0
  %v872 = vmul.f32 %v871, 1.442695
  %v873 = vpow.pop %v872
  %v874 = vsub.f32 %v873, 1.0
  %v875 = vsel %vm870, %v869, %v874
  %v876 = vld [vmem:[%s0 + $0x1c] sm:$0xf]
  %v878 = vsel %vm135, %v876, 0
  %880 = vmatpush.msra.mxu0 0.0
  %881 = vmatpush.msra.mxu0 0.0
  %882 = vmatpush.msra.mxu0 0.0
  %883 = vmatpush.msra.mxu0 0.0
  %884 = vmatpush.msra.mxu0 0.0
  %885 = vmatpush.msra.mxu0 0.0
  %886 = vmatpush.msra.mxu0 0.0
  %887 = vmatpush.msra.mxu0 0.0
  %888 = vmatpush.msra.mxu0 0.0
  %889 = vmatpush.msra.mxu0 0.0
  %890 = vmatpush.msra.mxu0 0.0
  %891 = vmatpush.msra.mxu0 0.0
  %892 = vmatpush.msra.mxu0 %v141
  %893 = vmatpush.msra.mxu0 %v47
  %894 = vmatpush.msra.mxu0 %v46
  %895 = vmatpush.msra.mxu0 %v45
  %896 = vmatmul.f32.gmra.mxu0 %v878
  %v897 = vpop.f32.mrf.mxu0
  %v898 = vadd.f32 0.0, %v897
  %899 = vdwg.mxu0
  %900 = vmatpush.msra.mxu0 0.0
  %901 = vmatpush.msra.mxu0 0.0
  %902 = vmatpush.msra.mxu0 0.0
  %903 = vmatpush.msra.mxu0 0.0
  %904 = vmatpush.msra.mxu0 0.0
  %905 = vmatpush.msra.mxu0 0.0
  %906 = vmatpush.msra.mxu0 0.0
  %907 = vmatpush.msra.mxu0 0.0
  %908 = vmatpush.msra.mxu0 0.0
  %909 = vmatpush.msra.mxu0 0.0
  %910 = vmatpush.msra.mxu0 0.0
  %911 = vmatpush.msra.mxu0 0.0
  %912 = vmatpush.msra.mxu0 %v167
  %913 = vmatpush.msra.mxu0 %v42
  %914 = vmatpush.msra.mxu0 %v41
  %915 = vmatpush.msra.mxu0 %v40
  %916 = vmatmul.f32.gmra.mxu0 %v824
  %v917 = vpop.f32.mrf.mxu0
  %v918 = vadd.f32 %v898, %v917
  %919 = vdwg.mxu0
  %v920 = vadd.f32 %v918, %v190
  %vm921 = vcmp.gt.f32.partialorder %v920, 0.0
  %v922 = vmin.f32 %v920, 0.0
  %v923 = vmul.f32 %v922, 1.442695
  %v924 = vpow.pop %v923
  %v925 = vsub.f32 %v924, 1.0
  %v926 = vsel %vm921, %v920, %v925
  %928 = vrot.lane.b32.xlu0 %v875, 64
  %v929 = vpop.permute.xlu0 %928
  %v931 = vmax.f32 %v875, %v929
  %933 = vrot.lane.b32.xlu0 %v926, 64
  %v934 = vpop.permute.xlu0 %933
  %v936 = vmax.f32 %v926, %v934
  %v937 = vmax.f32 %v931, %v936
  %v939 = vrot.slane %v937, 1
  %v940 = vsel %vm263, %v939, 0
  %942 = vmatpush.msra.mxu0 0.0
  %943 = vmatpush.msra.mxu0 0.0
  %944 = vmatpush.msra.mxu0 0.0
  %945 = vmatpush.msra.mxu0 0.0
  %946 = vmatpush.msra.mxu0 0.0
  %947 = vmatpush.msra.mxu0 0.0
  %948 = vmatpush.msra.mxu0 0.0
  %949 = vmatpush.msra.mxu0 0.0
  %950 = vmatpush.msra.mxu0 %v65
  %951 = vmatpush.msra.mxu0 %v64
  %952 = vmatpush.msra.mxu0 %v63
  %953 = vmatpush.msra.mxu0 %v62
  %954 = vmatpush.msra.mxu0 %v61
  %955 = vmatpush.msra.mxu0 %v60
  %956 = vmatpush.msra.mxu0 %v59
  %957 = vmatpush.msra.mxu0 %v58
  %958 = vmatmul.f32.gmra.mxu0 %v940
  %v959 = vpop.f32.mrf.mxu0
  %v960 = vadd.f32 0.0, %v959
  %961 = vdwg.mxu0
  %v962 = vsel %vm263, %v937, 0
  %964 = vmatpush.msra.mxu0 0.0
  %965 = vmatpush.msra.mxu0 0.0
  %966 = vmatpush.msra.mxu0 0.0
  %967 = vmatpush.msra.mxu0 0.0
  %968 = vmatpush.msra.mxu0 0.0
  %969 = vmatpush.msra.mxu0 0.0
  %970 = vmatpush.msra.mxu0 0.0
  %971 = vmatpush.msra.mxu0 0.0
  %972 = vmatpush.msra.mxu0 %v56
  %973 = vmatpush.msra.mxu0 %v55
  %974 = vmatpush.msra.mxu0 %v54
  %975 = vmatpush.msra.mxu0 %v53
  %976 = vmatpush.msra.mxu0 %v52
  %977 = vmatpush.msra.mxu0 %v51
  %978 = vmatpush.msra.mxu0 %v50
  %979 = vmatpush.msra.mxu0 %v49
  %980 = vmatmul.f32.gmra.mxu0 %v962
  %v981 = vpop.f32.mrf.mxu0
  %v982 = vadd.f32 %v960, %v981
  %983 = vdwg.mxu0
  %v984 = vadd.f32 %v982, %v309
  %vm985 = vcmp.gt.f32.partialorder %v984, 0.0
  %v986 = vmin.f32 %v984, 0.0
  %v987 = vmul.f32 %v986, 1.442695
  %v988 = vpow.pop %v987
  %v989 = vsub.f32 %v988, 1.0
  %v990 = vsel %vm985, %v984, %v989
  %v992 = vrot.slane %v990, 1
  %v993 = vsel %vm320, %v992, 0
  %995 = vmatpush.msra.mxu0 0.0
  %996 = vmatpush.msra.mxu0 0.0
  %997 = vmatpush.msra.mxu0 0.0
  %998 = vmatpush.msra.mxu0 0.0
  %999 = vmatpush.msra.mxu0 %v90
  %1000 = vmatpush.msra.mxu0 %v89
  %1001 = vmatpush.msra.mxu0 %v88
  %1002 = vmatpush.msra.mxu0 %v87
  %1003 = vmatpush.msra.mxu0 %v86
  %1004 = vmatpush.msra.mxu0 %v85
  %1005 = vmatpush.msra.mxu0 %v84
  %1006 = vmatpush.msra.mxu0 %v83
  %1007 = vmatpush.msra.mxu0 %v82
  %1008 = vmatpush.msra.mxu0 %v81
  %1009 = vmatpush.msra.mxu0 %v80
  %1010 = vmatpush.msra.mxu0 %v79
  %1011 = vmatmul.f32.gmra.mxu0 %v993
  %v1012 = vpop.f32.mrf.mxu0
  %v1013 = vadd.f32 0.0, %v1012
  %1014 = vdwg.mxu0
  %v1015 = vsel %vm320, %v990, 0
  %1017 = vmatpush.msra.mxu0 0.0
  %1018 = vmatpush.msra.mxu0 0.0
  %1019 = vmatpush.msra.mxu0 0.0
  %1020 = vmatpush.msra.mxu0 0.0
  %1021 = vmatpush.msra.mxu0 %v77
  %1022 = vmatpush.msra.mxu0 %v76
  %1023 = vmatpush.msra.mxu0 %v75
  %1024 = vmatpush.msra.mxu0 %v74
  %1025 = vmatpush.msra.mxu0 %v73
  %1026 = vmatpush.msra.mxu0 %v72
  %1027 = vmatpush.msra.mxu0 %v71
  %1028 = vmatpush.msra.mxu0 %v70
  %1029 = vmatpush.msra.mxu0 %v69
  %1030 = vmatpush.msra.mxu0 %v68
  %1031 = vmatpush.msra.mxu0 %v67
  %1032 = vmatpush.msra.mxu0 %v66
  %1033 = vmatmul.f32.gmra.mxu0 %v1015
  %v1034 = vpop.f32.mrf.mxu0
  %v1035 = vadd.f32 %v1013, %v1034
  %1036 = vdwg.mxu0
  %v1037 = vadd.f32 %v1035, %v366
  %vm1038 = vcmp.gt.f32.partialorder %v1037, 0.0
  %v1039 = vmin.f32 %v1037, 0.0
  %v1040 = vmul.f32 %v1039, 1.442695
  %v1041 = vpow.pop %v1040
  %v1042 = vsub.f32 %v1041, 1.0
  %v1043 = vsel %vm1038, %v1037, %v1042
  %v1045 = vrot.slane %v597, 7
  %v1048 = vrot.slane %v820, 6
  %v1051 = vrot.slane %v1043, 5
  %vm1053 = vcmask 1040384
  %v1054 = vsel %vm1053, %v374, %v1045
  %vm1055 = vcmask 1041408
  %v1056 = vsel %vm1055, %v1054, %v1048
  %v1057 = vsel %vm139, %v1056, %v1051
  %v1059 = vrot.slane %v374, 1
  %v1061 = vrot.slane %v820, 7
  %v1063 = vrot.slane %v1043, 6
  %v1065 = vsel %vm1053, %v1059, %v597
  %v1066 = vsel %vm1055, %v1065, %v1061
  %v1067 = vsel %vm139, %v1066, %v1063
  %1068 = vmatpush.msra.mxu0 %v123
  %1069 = vmatpush.msra.mxu0 %v122
  %1070 = vmatpush.msra.mxu0 %v121
  %1071 = vmatpush.msra.mxu0 %v120
  %1072 = vmatpush.msra.mxu0 %v119
  %1073 = vmatpush.msra.mxu0 %v118
  %1074 = vmatpush.msra.mxu0 %v117
  %1075 = vmatpush.msra.mxu0 %v116
  %1076 = vmatpush.msra.mxu0 %v115
  %1077 = vmatpush.msra.mxu0 %v114
  %1078 = vmatpush.msra.mxu0 %v113
  %1079 = vmatpush.msra.mxu0 %v112
  %1080 = vmatpush.msra.mxu0 %v111
  %1081 = vmatpush.msra.mxu0 %v110
  %1082 = vmatpush.msra.mxu0 %v109
  %1083 = vmatpush.msra.mxu0 %v108
  %1084 = vmatmul.f32.gmra.mxu0 %v1067
  %v1085 = vpop.f32.mrf.mxu0
  %v1086 = vadd.f32 0.0, %v1085
  %1087 = vdwg.mxu0
  %1088 = vmatpush.msra.mxu0 %v106
  %1089 = vmatpush.msra.mxu0 %v105
  %1090 = vmatpush.msra.mxu0 %v104
  %1091 = vmatpush.msra.mxu0 %v103
  %1092 = vmatpush.msra.mxu0 %v102
  %1093 = vmatpush.msra.mxu0 %v101
  %1094 = vmatpush.msra.mxu0 %v100
  %1095 = vmatpush.msra.mxu0 %v99
  %1096 = vmatpush.msra.mxu0 %v98
  %1097 = vmatpush.msra.mxu0 %v97
  %1098 = vmatpush.msra.mxu0 %v96
  %1099 = vmatpush.msra.mxu0 %v95
  %1100 = vmatpush.msra.mxu0 %v94
  %1101 = vmatpush.msra.mxu0 %v93
  %1102 = vmatpush.msra.mxu0 %v92
  %1103 = vmatpush.msra.mxu0 %v91
  %1104 = vmatmul.f32.gmra.mxu0 %v1057
  %v1105 = vpop.f32.mrf.mxu0
  %v1106 = vadd.f32 %v1086, %v1105
  %1107 = vdwg.mxu0
  %v1109 = vperm.slane %v127, 0
  %v1111 = vadd.f32 %v1106, %v1109
  %v1112 = vmax.f32 %v1111, 0.0
  %v1114 = vperm.slane %v132, 0
  %vm1116 = vcmask 261120
  %v1118 = vsel %vm1116, %v1112, 0
  %1120 = vmatpush.msra.mxu0 0.0
  %1121 = vmatpush.msra.mxu0 0.0
  %1122 = vmatpush.msra.mxu0 0.0
  %1123 = vmatpush.msra.mxu0 0.0
  %1124 = vmatpush.msra.mxu0 0.0
  %1125 = vmatpush.msra.mxu0 0.0
  %1126 = vmatpush.msra.mxu0 0.0
  %1127 = vmatpush.msra.mxu0 0.0
  %1128 = vmatpush.msra.mxu0 0.0
  %1129 = vmatpush.msra.mxu0 0.0
  %1130 = vmatpush.msra.mxu0 0.0
  %1131 = vmatpush.msra.mxu0 0.0
  %1132 = vmatpush.msra.mxu0 %v131
  %1133 = vmatpush.msra.mxu0 %v130
  %1134 = vmatpush.msra.mxu0 %v129
  %1135 = vmatpush.msra.mxu0 %v128
  %1136 = vmatmul.f32.gmra.mxu0 %v1118
  %v1137 = vpop.f32.mrf.mxu0
  %v1138 = vadd.f32 %v1114, %v1137
  %1139 = vdwg.mxu0
  %vm1140 = vcmask 44032
  %1141 = vst.msk [vmem:[%s11] sm:$0xf] %vm1140, %v1138
  %vm1142 = vcmask 35840
  %v1143 = vsel %vm1142, %v1138, -inf
  %1144 = vmax.xlane.f32.xlu0 %v1143
  %v1145 = vpop.xlane.xlu0 %1144
  %v1146 = vlaneseq
  %v1147 = vand.u32 %v1146, 127
  %vm1148 = vcmp.eq.f32.partialorder %v1138, %v1145
  %v1149 = vsel %vm1148, %v1147, 2147483647
  %v1150 = vsel %vm1142, %v1149, 2147483647
  %v1151 = vand.u32 %v1150, 65535
  %v1152 = vshra.s32 %v1150, 16
  %v1153 = vcvt.s32.f32 %v1151
  %v1154 = vcvt.s32.f32 %v1152
  %1155 = vmin.xlane.f32.xlu0 %v1154
  %v1156 = vpop.xlane.xlu0 %1155
  %vm1157 = vcmp.eq.f32.partialorder %v1154, %v1156
  %v1158 = vsel %vm1157, %v1153, inf
  %1159 = vmin.xlane.f32.xlu0 %v1158
  %v1160 = vpop.xlane.xlu0 %1159
  %v1161 = vcvt.f32.s32 %v1160
  %v1162 = vcvt.f32.s32 %v1156
  %v1163 = vshll.u32 %v1162, 16
  %v1164 = vadd.s32 %v1163, %v1161
  %vm1165 = vcmask 3072
  %1166 = vst.msk [vmem:[%s12] sm:$0xf] %vm1165, %v1164
  // Predicated region
  $region46: #{gridnet_forward.1} parent=0 // pred_check
    _
  $region47: #{gridnet_forward.1} parent=0 // pred_check_branch
    %1168 = sbr.rel (0) target = $region49
  $region48: #{gridnet_forward.1} parent=0 // pred_region
    _
  $region49: #{gridnet_forward.1} parent=0 // pred_fallthru
    _
  // Predicated region
  $region50: #{gridnet_forward.1} parent=0 // pred_check
    _
  $region51: #{gridnet_forward.1} parent=0 // pred_check_branch
    %1170 = sbr.rel (0) target = $region53
  $region52: #{gridnet_forward.1} parent=0 // pred_region
    _
  $region53: #{gridnet_forward.1} parent=0 // pred_fallthru
    _
  // Predicated region
  $region54: #{gridnet_forward.1} parent=0 // pred_check
    _
  $region55: #{gridnet_forward.1} parent=0 // pred_check_branch
    %1172 = sbr.rel (0) target = $region57
  $region56: #{gridnet_forward.1} parent=0 // pred_region
    _
  $region57: #{gridnet_forward.1} parent=0 // pred_fallthru
    _
  // Predicated region
  $region58: #{gridnet_forward.1} parent=0 // pred_check
    _
  $region59: #{gridnet_forward.1} parent=0 // pred_check_branch
    %1174 = sbr.rel (0) target = $region61
  $region60: #{gridnet_forward.1} parent=0 // pred_region
    _
  $region61: #{gridnet_forward.1} parent=0 // pred_fallthru
    _

</llo_original>
